<compile_context>
chip_gen: v6e
topology: v6e:2x2x1
jax: 0.10.0
libtpu: 0.0.40
codegen_flags: <defaults>
</compile_context>

<pallas_src>
import jax
import jax.numpy as jnp
import numpy as np
from jax.experimental import pallas as pl
from jax.experimental.pallas import tpu as pltpu


def _round_up(x, m):
    return ((x + m - 1) // m) * m


def attn_net_kernel(x_ref, w1_ref, b1_ref, w2t_ref, b2_ref, at_ref):
    # Matmul 1 on the MXU: (tile_n, L) bf16 @ (L, D) bf16 -> f32 accumulate.
    h = jnp.dot(x_ref[...], w1_ref[...], preferred_element_type=jnp.float32)
    # Bias + tanh in f32 on VPU/EUP.
    h = jnp.tanh(h + b1_ref[...])                       # (tile_n, D) f32
    # Matmul 2, transposed so tile_n lands on lanes (lane-dense output):
    # (C, D) contract D with (tile_n, D)  ->  (C, tile_n)
    h_mm = h.astype(w2t_ref.dtype)
    at = jax.lax.dot_general(
        w2t_ref[...], h_mm,
        dimension_numbers=(((1,), (1,)), ((), ())),
        preferred_element_type=jnp.float32)
    at_ref[...] = (at + b2_ref[...]).astype(at_ref.dtype)


def attn_net_forward(x, w1, b1, w2, b2, *, tile_n=256, matmul_dtype=jnp.bfloat16):
    """x: (N, L).  w1: (L, D), b1: (D,), w2: (D, C), b2: (C,).

    Returns (A, x) with A: (N, C), matching the PyTorch module (dropout=False).
    """
    N, L = x.shape
    D = w1.shape[1]
    C = w2.shape[1]

    # Tile selection: multiple of 128 lanes for the lane-dense output block,
    # never larger than the padded bag size.
    tile_n = min(tile_n, _round_up(N, 128))
    tile_n = _round_up(max(tile_n, 128), 128)
    n_pad = _round_up(N, tile_n)

    # Matmul operands in bf16 (HBM + MXU savings); pad bag dim with zeros.
    x_mm = x.astype(matmul_dtype)
    if n_pad != N:
        x_mm = jnp.pad(x_mm, ((0, n_pad - N), (0, 0)))
    w1_mm = w1.astype(matmul_dtype)                     # (L, D)
    w2t_mm = w2.T.astype(matmul_dtype)                  # (C, D)
    b1_2d = b1.reshape(1, D).astype(jnp.float32)
    b2_2d = b2.reshape(C, 1).astype(jnp.float32)

    grid = (n_pad // tile_n,)

    a_t = pl.pallas_call(
        attn_net_kernel,
        out_shape=jax.ShapeDtypeStruct((C, n_pad), jnp.float32),
        grid_spec=pltpu.PrefetchScalarGridSpec(
            num_scalar_prefetch=0,
            grid=grid,
            in_specs=[
                pl.BlockSpec((tile_n, L), lambda i: (i, 0)),   # x tile (streamed)
                pl.BlockSpec((L, D), lambda i: (0, 0)),        # W1 (resident)
                pl.BlockSpec((1, D), lambda i: (0, 0)),        # b1
                pl.BlockSpec((C, D), lambda i: (0, 0)),        # W2^T
                pl.BlockSpec((C, 1), lambda i: (0, 0)),        # b2
            ],
            out_specs=pl.BlockSpec((C, tile_n), lambda i: (0, i)),  # A^T slab
        ),
        compiler_params=pltpu.CompilerParams(
            dimension_semantics=("parallel",)),
    )(x_mm, w1_mm, b1_2d, w2t_mm, b2_2d)

    # Back to PyTorch orientation; drop padding.  x is returned untouched.
    a = a_t[:, :N].T.astype(x.dtype)                    # (N, C)
    return a, x


def init_params(key, L, D, C):
    """Deterministic init mimicking nn.Linear's uniform(-1/sqrt(fan_in), ...)."""
    k1, k2, k3, k4 = jax.random.split(key, 4)
    lim1 = 1.0 / np.sqrt(L)
    lim2 = 1.0 / np.sqrt(D)
    # stored transposed relative to torch's (out, in): w1 is (L, D), w2 is (D, C)
    w1 = jax.random.uniform(k1, (L, D), jnp.float32, -lim1, lim1)
    b1 = jax.random.uniform(k2, (D,), jnp.float32, -lim1, lim1)
    w2 = jax.random.uniform(k3, (D, C), jnp.float32, -lim2, lim2)
    b2 = jax.random.uniform(k4, (C,), jnp.float32, -lim2, lim2)
    return w1, b1, w2, b2


if __name__ == "__main__":
    # Module defaults: L=1024, D=256, n_classes=1.  N=500 (non-multiple of the
    # tile) exercises the padding path and gives a 2-step grid (good for v7x).
    N, L, D, C = 500, 1024, 256, 1
    # TODO(synk): nn.Dropout(0.25) (only when dropout=True) is not implemented;
    # the default dropout=False forward path is what this kernel computes.

    key = jax.random.PRNGKey(0)
    kx, kp = jax.random.split(key)
    x = jax.random.normal(kx, (N, L), jnp.float32)
    w1, b1, w2, b2 = init_params(kp, L, D, C)

    a, x_out = attn_net_forward(x, w1, b1, w2, b2, tile_n=256)
    a = jax.block_until_ready(a)
    x_out = jax.block_until_ready(x_out)

    # Pure-f32 reference (module semantics); bf16 matmul inputs -> loose tol.
    h_ref = jnp.tanh(x @ w1 + b1)
    a_ref = h_ref @ w2 + b2
    assert a.shape == (N, C)
    assert x_out.shape == (N, L)
    np.testing.assert_allclose(np.asarray(a), np.asarray(a_ref), rtol=2e-2, atol=2e-2)
    np.testing.assert_array_equal(np.asarray(x_out), np.asarray(x))

    print("KERNEL_OK")
</pallas_src>

<mosaic_0001>
module attributes {stable_mosaic.version = 11 : i64} {
  func.func @attn_net_kernel(%arg0: i32, %arg1: memref<256x1024xbf16, #tpu.memory_space<vmem>>, %arg2: memref<1024x256xbf16, #tpu.memory_space<vmem>>, %arg3: memref<1x256xf32, #tpu.memory_space<vmem>>, %arg4: memref<1x256xbf16, #tpu.memory_space<vmem>>, %arg5: memref<1x1xf32, #tpu.memory_space<vmem>>, %arg6: memref<1x256xf32, #tpu.memory_space<vmem>>) attributes {dimension_semantics = [#tpu.dimension_semantics<parallel>], iteration_bounds = array<i64: 2>, scalar_prefetch = 0 : i64, scratch_operands = 0 : i64, tpu.core_type = #tpu.core_type<tc>, window_params = [{transform_indices = @transform_0, window_bounds = array<i64: 256, 1024>}, {pipeline_mode = #tpu.pipeline_mode<synchronous>, transform_indices = @transform_1, window_bounds = array<i64: 1024, 256>}, {pipeline_mode = #tpu.pipeline_mode<synchronous>, transform_indices = @transform_2, window_bounds = array<i64: 1, 256>}, {pipeline_mode = #tpu.pipeline_mode<synchronous>, transform_indices = @transform_3, window_bounds = array<i64: 1, 256>}, {pipeline_mode = #tpu.pipeline_mode<synchronous>, transform_indices = @transform_4, window_bounds = array<i64: 1, 1>}, {transform_indices = @transform_5, window_bounds = array<i64: 1, 256>}]} {
    %c0 = arith.constant 0 : index
    %c0_0 = arith.constant 0 : index
    %0 = vector.load %arg1[%c0, %c0_0] : memref<256x1024xbf16, #tpu.memory_space<vmem>>, vector<256x1024xbf16>
    %c0_1 = arith.constant 0 : index
    %c0_2 = arith.constant 0 : index
    %1 = vector.load %arg2[%c0_1, %c0_2] : memref<1024x256xbf16, #tpu.memory_space<vmem>>, vector<1024x256xbf16>
    %cst = arith.constant dense<0.000000e+00> : vector<256x256xf32>
    %2 = tpu.matmul %0, %1, %cst {dimension_numbers = #tpu.dot_dimension_numbers<[1], [0], [0], [1], [0, 0, 1, 1], [], []>} : vector<256x1024xbf16>, vector<1024x256xbf16>, vector<256x256xf32> -> vector<256x256xf32>
    %c0_3 = arith.constant 0 : index
    %c0_4 = arith.constant 0 : index
    %3 = vector.load %arg3[%c0_3, %c0_4] : memref<1x256xf32, #tpu.memory_space<vmem>>, vector<1x256xf32>
    %4 = vector.broadcast %3 : vector<1x256xf32> to vector<256x256xf32>
    %5 = arith.addf %2, %4 : vector<256x256xf32>
    %6 = math.tanh %5 : vector<256x256xf32>
    %7 = arith.truncf %6 : vector<256x256xf32> to vector<256x256xbf16>
    %c0_5 = arith.constant 0 : index
    %c0_6 = arith.constant 0 : index
    %8 = vector.load %arg4[%c0_5, %c0_6] : memref<1x256xbf16, #tpu.memory_space<vmem>>, vector<1x256xbf16>
    %cst_7 = arith.constant dense<0.000000e+00> : vector<1x256xf32>
    %9 = tpu.matmul %8, %7, %cst_7 {dimension_numbers = #tpu.dot_dimension_numbers<[1], [1], [0], [0], [0, 0, 1, 0], [], []>} : vector<1x256xbf16>, vector<256x256xbf16>, vector<1x256xf32> -> vector<1x256xf32>
    %c0_8 = arith.constant 0 : index
    %c0_9 = arith.constant 0 : index
    %10 = vector.load %arg5[%c0_8, %c0_9] : memref<1x1xf32, #tpu.memory_space<vmem>>, vector<1x1xf32>
    %11 = vector.broadcast %10 : vector<1x1xf32> to vector<1x256xf32>
    %12 = arith.addf %9, %11 : vector<1x256xf32>
    %c0_10 = arith.constant 0 : index
    %c0_11 = arith.constant 0 : index
    %13 = vector.load %arg6[%c0_10, %c0_11] : memref<1x256xf32, #tpu.memory_space<vmem>>, vector<1x256xf32>
    tpu.vector_store %arg6[%c0_10, %c0_11], %12 {strides = array<i32>} : memref<1x256xf32, #tpu.memory_space<vmem>>, vector<1x256xf32>,
    return
  }
  func.func @transform_0(%arg0: i32) -> (i32, i32) {
    %c0_i32 = arith.constant 0 : i32
    %c0_i32_0 = arith.constant 0 : i32
    return %arg0, %c0_i32 : i32, i32
  }
  func.func @transform_1(%arg0: i32) -> (i32, i32) {
    %c0_i32 = arith.constant 0 : i32
    %c0_i32_0 = arith.constant 0 : i32
    %c0_i32_1 = arith.constant 0 : i32
    return %c0_i32, %c0_i32_0 : i32, i32
  }
  func.func @transform_2(%arg0: i32) -> (i32, i32) {
    %c0_i32 = arith.constant 0 : i32
    %c0_i32_0 = arith.constant 0 : i32
    %c0_i32_1 = arith.constant 0 : i32
    return %c0_i32, %c0_i32_0 : i32, i32
  }
  func.func @transform_3(%arg0: i32) -> (i32, i32) {
    %c0_i32 = arith.constant 0 : i32
    %c0_i32_0 = arith.constant 0 : i32
    %c0_i32_1 = arith.constant 0 : i32
    return %c0_i32, %c0_i32_0 : i32, i32
  }
  func.func @transform_4(%arg0: i32) -> (i32, i32) {
    %c0_i32 = arith.constant 0 : i32
    %c0_i32_0 = arith.constant 0 : i32
    %c0_i32_1 = arith.constant 0 : i32
    return %c0_i32, %c0_i32_0 : i32, i32
  }
  func.func @transform_5(%arg0: i32) -> (i32, i32) {
    %c0_i32 = arith.constant 0 : i32
    %c0_i32_0 = arith.constant 0 : i32
    return %c0_i32, %arg0 : i32, i32
  }
}

</mosaic_0001>

<llo_original>
// kernel: tpu_custom_call.1
$region0: #{tpu_custom_call.1}
  #allocation0 [shape = 'u32[]', space=smem, size = 0x4, offset = 0x4, fixed_abs, tag = 'smem constant byte address 0x4 - core index']
  #allocation1 [shape = 'u32[144,128]{1,0:T(1,128)}', space=vmem, size = 0x12000, scoped, tag = 'internal scratch']
  #allocation2 [shape = 'f32[1,1]{1,0:T(1,128)S(1)}', space=vmem, size = 0x200, scoped, tag = 'scoped memory for tpu_custom_call.1']
  %s0 = inlined_call_operand.hbm [shape: bf16[512,1024], index: 0, kind: input, shape index: {}]
  %s1 = inlined_call_operand.hbm [shape: bf16[1024,256], index: 1, kind: input, shape index: {}]
  %s2 = inlined_call_operand.vmem [shape: f32[1,256], index: 2, kind: input, shape index: {}]
  %s3 = inlined_call_operand.vmem [shape: bf16[1,256], index: 3, kind: input, shape index: {}]
  %s4 = inlined_call_operand.<no memory space> [shape: f32[1,1], index: 4, kind: input, shape index: {}]
  %s5 = inlined_call_operand.hbm [shape: f32[1,512], index: 5, kind: output, shape index: {}]
  %s6 = sld [smem:[#allocation0]]
  $region61: #{tpu_custom_call.1} parent=0
    _
  %s8 = ssub.s32 1, %s6
  %s9 = scalar_select 0, %s8, %s6
  %v10 = vstv %s4
  %11 = vst [vmem:[#allocation2] sm:$0x1] %v10
  $region1: #{tpu_custom_call.1} parent=0
    #allocation3 [shape = 'u8[1048576]{0}', space=vmem, size = 0x100000, scoped, tag = 'input window, operand 0']
    #allocation4 [shape = 's32[2]{0}', space=sflag, size = 0x8, scoped, tag = 'scoped memory for tpu_custom_call.1']
    #allocation5 [shape = 's32[2]{0}', space=sflag, size = 0x8, scoped, tag = 'scoped memory for tpu_custom_call.1']
    #allocation6 [shape = 'u8[524288]{0}', space=vmem, size = 0x80000, scoped, tag = 'input window, operand 1, single buffered']
    #allocation7 [shape = 's32[1]{0}', space=sflag, size = 0x4, scoped, tag = 'scoped memory for tpu_custom_call.1']
    #allocation8 [shape = 'u8[2048]{0}', space=vmem, size = 0x800, scoped, tag = 'output window, operand 0']
    %12 = vsyncpa [#allocation4], 0
    %s13 = scalar_lea.sflag [#allocation4], 1
    %14 = vsyncpa %s13, 0
    %15 = vsyncpa [#allocation7], 0
    %16 = vsyncpa [#allocation5], 0
    %s17 = scalar_lea.sflag [#allocation5], 1
    %18 = vsyncpa %s17, 0
    loop: start=0, step=1, limit=4
    $region2: #{tpu_custom_call.1} parent=1 // loop_pre_header
      _
    $region3: #{tpu_custom_call.1} parent=1 // loop_header
      %s20 = sphi 0, %s24
      %p21 = scmp.ge.s32.totalorder %s20, 4
      %s30 = sphi 0, %s32
      %s33 = sphi 0, %s30
      %s34 = sphi 0, %s33
      %s50 = sphi 0, %s34
      %s54 = sphi 0, %s54
      %s56 = sphi 0, %s54
      %s57 = sphi 0, %s56
      %s71 = sphi 0, %s57
      %s75 = sphi 0, %s75
      %s77 = sphi 0, %s75
      %s78 = sphi 0, %s77
      %s92 = sphi 0, %s78
      %s96 = sphi 0, %s96
      %s98 = sphi 0, %s96
      %s99 = sphi 0, %s98
      %s113 = sphi 0, %s99
      %s117 = sphi 0, %s117
      %s119 = sphi 0, %s117
      %s120 = sphi 0, %s119
      %s134 = sphi 0, %s120
      %s140 = sphi 0, %s142
      %s143 = sphi 0, %s140
      %s144 = sphi 0, %s143
      %s160 = sphi 0, %s144
    $region4: #{tpu_custom_call.1} parent=1 // loop_header_branch
      %23 = sbr.rel (%p21) target = $region8
    $region5: #{tpu_custom_call.1} parent=1 // loop_body
      %s25 = ssub.s32 %s20, 1
      %s26 = ssub.s32 %s20, 2
      %s27 = sadd.s32 %s20, 1
      %s28 = ssub.s32 %s20, %s27
      %p29 = scmp.eq.s32.totalorder %s28, 0
      %s31 = sadd.s32 %s30, 1
      %s32 = scalar_select %p29, %s30, %s31
      %p35 = pneg %p29
      %p36 = scmp.eq.s32.totalorder %s20, 1
      %p37 = por %p35, %p36
      %p38 = scmp.ne.s32.totalorder %s30, %s33
      %p39 = scmp.eq.s32.totalorder %s20, 0
      %p40 = por %p38, %p39
      %p41 = scmp.ne.s32.totalorder %s30, %s33
      %p42 = scmp.eq.s32.totalorder %s25, 1
      %p43 = por %p41, %p42
      %p44 = scmp.ne.s32.totalorder %s33, %s34
      %p45 = scmp.eq.s32.totalorder %s25, 0
      %p46 = por %p44, %p45
      %p47 = scmp.ne.s32.totalorder %s33, %s34
      %p48 = scmp.eq.s32.totalorder %s26, 1
      %p49 = por %p47, %p48
      %p51 = scmp.ne.s32.totalorder %s34, %s50
      %p52 = scmp.eq.s32.totalorder %s26, 0
      %p53 = por %p51, %p52
      %s55 = sadd.s32 %s54, 1
      %p58 = scmp.eq.s32.totalorder %s20, 1
      %p59 = scmp.ne.s32.totalorder %s54, %s56
      %p60 = scmp.eq.s32.totalorder %s20, 0
      %p61 = por %p59, %p60
      %p62 = scmp.ne.s32.totalorder %s54, %s56
      %p63 = scmp.eq.s32.totalorder %s25, 1
      %p64 = por %p62, %p63
      %p65 = scmp.ne.s32.totalorder %s56, %s57
      %p66 = scmp.eq.s32.totalorder %s25, 0
      %p67 = por %p65, %p66
      %p68 = scmp.ne.s32.totalorder %s56, %s57
      %p69 = scmp.eq.s32.totalorder %s26, 1
      %p70 = por %p68, %p69
      %p72 = scmp.ne.s32.totalorder %s57, %s71
      %p73 = scmp.eq.s32.totalorder %s26, 0
      %p74 = por %p72, %p73
      %s76 = sadd.s32 %s75, 1
      %p79 = scmp.eq.s32.totalorder %s20, 1
      %p80 = scmp.ne.s32.totalorder %s75, %s77
      %p81 = scmp.eq.s32.totalorder %s20, 0
      %p82 = por %p80, %p81
      %p83 = scmp.ne.s32.totalorder %s75, %s77
      %p84 = scmp.eq.s32.totalorder %s25, 1
      %p85 = por %p83, %p84
      %p86 = scmp.ne.s32.totalorder %s77, %s78
      %p87 = scmp.eq.s32.totalorder %s25, 0
      %p88 = por %p86, %p87
      %p89 = scmp.ne.s32.totalorder %s77, %s78
      %p90 = scmp.eq.s32.totalorder %s26, 1
      %p91 = por %p89, %p90
      %p93 = scmp.ne.s32.totalorder %s78, %s92
      %p94 = scmp.eq.s32.totalorder %s26, 0
      %p95 = por %p93, %p94
      %s97 = sadd.s32 %s96, 1
      %p100 = scmp.eq.s32.totalorder %s20, 1
      %p101 = scmp.ne.s32.totalorder %s96, %s98
      %p102 = scmp.eq.s32.totalorder %s20, 0
      %p103 = por %p101, %p102
      %p104 = scmp.ne.s32.totalorder %s96, %s98
      %p105 = scmp.eq.s32.totalorder %s25, 1
      %p106 = por %p104, %p105
      %p107 = scmp.ne.s32.totalorder %s98, %s99
      %p108 = scmp.eq.s32.totalorder %s25, 0
      %p109 = por %p107, %p108
      %p110 = scmp.ne.s32.totalorder %s98, %s99
      %p111 = scmp.eq.s32.totalorder %s26, 1
      %p112 = por %p110, %p111
      %p114 = scmp.ne.s32.totalorder %s99, %s113
      %p115 = scmp.eq.s32.totalorder %s26, 0
      %p116 = por %p114, %p115
      %s118 = sadd.s32 %s117, 1
      %p121 = scmp.eq.s32.totalorder %s20, 1
      %p122 = scmp.ne.s32.totalorder %s117, %s119
      %p123 = scmp.eq.s32.totalorder %s20, 0
      %p124 = por %p122, %p123
      %p125 = scmp.ne.s32.totalorder %s117, %s119
      %p126 = scmp.eq.s32.totalorder %s25, 1
      %p127 = por %p125, %p126
      %p128 = scmp.ne.s32.totalorder %s119, %s120
      %p129 = scmp.eq.s32.totalorder %s25, 0
      %p130 = por %p128, %p129
      %p131 = scmp.ne.s32.totalorder %s119, %s120
      %p132 = scmp.eq.s32.totalorder %s26, 1
      %p133 = por %p131, %p132
      %p135 = scmp.ne.s32.totalorder %s120, %s134
      %p136 = scmp.eq.s32.totalorder %s26, 0
      %p137 = por %p135, %p136
      %s138 = ssub.s32 %s20, %s27
      %p139 = scmp.eq.s32.totalorder %s138, 0
      %s141 = sadd.s32 %s140, 1
      %s142 = scalar_select %p139, %s140, %s141
      %p145 = pneg %p139
      %p146 = scmp.eq.s32.totalorder %s20, 1
      %p147 = por %p145, %p146
      %p148 = scmp.ne.s32.totalorder %s140, %s143
      %p149 = scmp.eq.s32.totalorder %s20, 0
      %p150 = por %p148, %p149
      %p151 = scmp.ne.s32.totalorder %s140, %s143
      %p152 = scmp.eq.s32.totalorder %s25, 1
      %p153 = por %p151, %p152
      %p154 = scmp.ne.s32.totalorder %s143, %s144
      %p155 = scmp.eq.s32.totalorder %s25, 0
      %p156 = por %p154, %p155
      %p157 = scmp.ne.s32.totalorder %s143, %s144
      %p158 = scmp.eq.s32.totalorder %s26, 1
      %p159 = por %p157, %p158
      %p161 = scmp.ne.s32.totalorder %s144, %s160
      %p162 = scmp.eq.s32.totalorder %s26, 0
      %p163 = por %p161, %p162
      %p164 = scmp.le.s32.totalorder 1, %s20
      %p165 = scmp.lt.s32.totalorder %s20, 3
      %p166 = pnand %p164, %p165
      %p167 = pneg %p166
      // Predicated region
      $region9: #{tpu_custom_call.1} parent=5 // pred_check
        _
      $region10: #{tpu_custom_call.1} parent=5 // pred_check_branch
        %169 = sbr.rel (%p166) target = $region12
      $region11: #{tpu_custom_call.1} parent=5 // pred_region
        %s170 = ssub.s32 %s20, 1
        // Predicated region
        $region13: #{tpu_custom_call.1} parent=11 // pred_check
          %p171 = pneg %p67
        $region14: #{tpu_custom_call.1} parent=11 // pred_check_branch
          %173 = sbr.rel (%p171) target = $region16
        $region15: #{tpu_custom_call.1} parent=11 // pred_region
          %s175 = ssub.s32 16384, 16384
          %176 = vsyncadd [#allocation7], %s175
          %s177 = sshll.u32 [#allocation6], 4
          %s178 = int_to_ptr.vmem [resolvable:$true] %s177
          %183 = dma.hbm_to_vmem [thread:$0]  %s1, 16384, %s178, [#allocation7], 128, 128, 8
        $region16: #{tpu_custom_call.1} parent=11 // pred_fallthru
          _
        // Predicated region
        $region17: #{tpu_custom_call.1} parent=11 // pred_check
          %p184 = pneg %p88
        $region18: #{tpu_custom_call.1} parent=11 // pred_check_branch
          %186 = sbr.rel (%p184) target = $region20
        $region19: #{tpu_custom_call.1} parent=11 // pred_region
          _
        $region20: #{tpu_custom_call.1} parent=11 // pred_fallthru
          _
        // Predicated region
        $region21: #{tpu_custom_call.1} parent=11 // pred_check
          %p187 = pneg %p109
        $region22: #{tpu_custom_call.1} parent=11 // pred_check_branch
          %189 = sbr.rel (%p187) target = $region24
        $region23: #{tpu_custom_call.1} parent=11 // pred_region
          _
        $region24: #{tpu_custom_call.1} parent=11 // pred_fallthru
          _
        // Predicated region
        $region25: #{tpu_custom_call.1} parent=11 // pred_check
          %p190 = pneg %p130
        $region26: #{tpu_custom_call.1} parent=11 // pred_check_branch
          %192 = sbr.rel (%p190) target = $region28
        $region27: #{tpu_custom_call.1} parent=11 // pred_region
          _
        $region28: #{tpu_custom_call.1} parent=11 // pred_fallthru
          _
      $region12: #{tpu_custom_call.1} parent=5 // pred_fallthru
        _
      %p193 = scmp.lt.s32.totalorder %s20, 2
      // Predicated region
      $region29: #{tpu_custom_call.1} parent=5 // pred_check
        %p194 = pneg %p193
      $region30: #{tpu_custom_call.1} parent=5 // pred_check_branch
        %196 = sbr.rel (%p194) target = $region32
      $region31: #{tpu_custom_call.1} parent=5 // pred_region
        // Predicated region
        $region33: #{tpu_custom_call.1} parent=31 // pred_check
          %p197 = pneg %p40
        $region34: #{tpu_custom_call.1} parent=31 // pred_check_branch
          %199 = sbr.rel (%p197) target = $region36
        $region35: #{tpu_custom_call.1} parent=31 // pred_region
          %s200 = sand.u32 %s30, 1
          %s201 = scalar_lea.sflag [#allocation4], %s200
          %s202 = sand.u32 %s30, 1
          %s203 = smul.addr %s202, 1024
          %s204 = scalar_lea.vmem [#allocation3], %s203
          %s205 = smul.u32 32, %s20
          %s207 = ssub.s32 16384, 16384
          %208 = vsyncadd %s201, %s207
          %s209 = smul.addr %s205, 8
          %s210 = smul.addr %s209, 64
          %s211 = scalar_lea.hbm %s0, %s210
          %s212 = sshll.u32 %s204, 4
          %s213 = int_to_ptr.vmem [resolvable:$true] %s212
          %218 = dma.hbm_to_vmem [thread:$0]  %s211, 16384, %s213, %s201, 512, 512, 32
        $region36: #{tpu_custom_call.1} parent=31 // pred_fallthru
          _
      $region32: #{tpu_custom_call.1} parent=5 // pred_fallthru
        _
      %p219 = scmp.le.s32.totalorder 1, %s20
      %p220 = scmp.lt.s32.totalorder %s20, 3
      %p221 = pnand %p219, %p220
      %p222 = pneg %p221
      // Predicated region
      $region37: #{tpu_custom_call.1} parent=5 // pred_check
        _
      $region38: #{tpu_custom_call.1} parent=5 // pred_check_branch
        %224 = sbr.rel (%p221) target = $region40
      $region39: #{tpu_custom_call.1} parent=5 // pred_region
        %s225 = ssub.s32 %s20, 1
        %s226 = sand.u32 %s33, 1
        %s227 = scalar_lea.sflag [#allocation4], %s226
        %s228 = sand.u32 %s33, 1
        %s229 = smul.addr %s228, 1024
        %s230 = scalar_lea.vmem [#allocation3], %s229
        // Predicated region
        $region41: #{tpu_custom_call.1} parent=39 // pred_check
          %p231 = pneg %p46
        $region42: #{tpu_custom_call.1} parent=39 // pred_check_branch
          %233 = sbr.rel (%p231) target = $region44
        $region43: #{tpu_custom_call.1} parent=39 // pred_region
          %234 = dma.done %s227, 16384
        $region44: #{tpu_custom_call.1} parent=39 // pred_fallthru
          _
        // Predicated region
        $region45: #{tpu_custom_call.1} parent=39 // pred_check
          %p235 = pneg %p67
        $region46: #{tpu_custom_call.1} parent=39 // pred_check_branch
          %237 = sbr.rel (%p235) target = $region48
        $region47: #{tpu_custom_call.1} parent=39 // pred_region
          %238 = dma.done [#allocation7], 16384
        $region48: #{tpu_custom_call.1} parent=39 // pred_fallthru
          _
        %s239 = sand.u32 %s33, 1
        %s240 = scalar_lea.sflag [#allocation4], %s239
        %s241 = sand.u32 %s33, 1
        %s242 = smul.addr %s241, 1024
        %s243 = scalar_lea.vmem [#allocation3], %s242
        %p244 = pneg %p46
        %p245 = pneg %p43
        %p246 = pneg %p67
        %p247 = pneg %p64
        %p248 = pneg %p88
        %p249 = pneg %p85
        %p250 = pneg %p109
        %p251 = pneg %p106
        %p252 = pneg %p130
        %p253 = pneg %p127
        %p254 = pneg %p156
        %p255 = pneg %p153
        %s256 = sand.u32 %s143, 1
        %s257 = scalar_lea.sflag [#allocation5], %s256
        %s258 = sand.u32 %s143, 1
        %s259 = smul.addr %s258, 2
        %s260 = scalar_lea.vmem [#allocation8], %s259
        %s261 = smul.u32 32, %s25
        %s262 = smul.u32 2, %s25
        %v263 = vld [vmem:[%s230] sm:$0xff]
        %v264 = vld [vmem:[%s230 + $0x8] sm:$0xff]
        %v265 = vld [vmem:[%s230 + $0x10] sm:$0xff]
        %v266 = vld [vmem:[%s230 + $0x18] sm:$0xff]
        %v267 = vld [vmem:[%s230 + $0x20] sm:$0xff]
        %v268 = vld [vmem:[%s230 + $0x28] sm:$0xff]
        %v269 = vld [vmem:[%s230 + $0x30] sm:$0xff]
        %v270 = vld [vmem:[%s230 + $0x38] sm:$0xff]
        %v271 = vld [vmem:[%s230 + $0x40] sm:$0xff]
        %v272 = vld [vmem:[%s230 + $0x48] sm:$0xff]
        %v273 = vld [vmem:[%s230 + $0x50] sm:$0xff]
        %v274 = vld [vmem:[%s230 + $0x58] sm:$0xff]
        %v275 = vld [vmem:[%s230 + $0x60] sm:$0xff]
        %v276 = vld [vmem:[%s230 + $0x68] sm:$0xff]
        %v277 = vld [vmem:[%s230 + $0x70] sm:$0xff]
        %v278 = vld [vmem:[%s230 + $0x78] sm:$0xff]
        %v279 = vld [vmem:[%s230 + $0x80] sm:$0xff]
        %v280 = vld [vmem:[%s230 + $0x88] sm:$0xff]
        %v281 = vld [vmem:[%s230 + $0x90] sm:$0xff]
        %v282 = vld [vmem:[%s230 + $0x98] sm:$0xff]
        %v283 = vld [vmem:[%s230 + $0xa0] sm:$0xff]
        %v284 = vld [vmem:[%s230 + $0xa8] sm:$0xff]
        %v285 = vld [vmem:[%s230 + $0xb0] sm:$0xff]
        %v286 = vld [vmem:[%s230 + $0xb8] sm:$0xff]
        %v287 = vld [vmem:[%s230 + $0xc0] sm:$0xff]
        %v288 = vld [vmem:[%s230 + $0xc8] sm:$0xff]
        %v289 = vld [vmem:[%s230 + $0xd0] sm:$0xff]
        %v290 = vld [vmem:[%s230 + $0xd8] sm:$0xff]
        %v291 = vld [vmem:[%s230 + $0xe0] sm:$0xff]
        %v292 = vld [vmem:[%s230 + $0xe8] sm:$0xff]
        %v293 = vld [vmem:[%s230 + $0xf0] sm:$0xff]
        %v294 = vld [vmem:[%s230 + $0xf8] sm:$0xff]
        %v295 = vld [vmem:[%s230 + $0x100] sm:$0xff]
        %v296 = vld [vmem:[%s230 + $0x108] sm:$0xff]
        %v297 = vld [vmem:[%s230 + $0x110] sm:$0xff]
        %v298 = vld [vmem:[%s230 + $0x118] sm:$0xff]
        %v299 = vld [vmem:[%s230 + $0x120] sm:$0xff]
        %v300 = vld [vmem:[%s230 + $0x128] sm:$0xff]
        %v301 = vld [vmem:[%s230 + $0x130] sm:$0xff]
        %v302 = vld [vmem:[%s230 + $0x138] sm:$0xff]
        %v303 = vld [vmem:[%s230 + $0x140] sm:$0xff]
        %v304 = vld [vmem:[%s230 + $0x148] sm:$0xff]
        %v305 = vld [vmem:[%s230 + $0x150] sm:$0xff]
        %v306 = vld [vmem:[%s230 + $0x158] sm:$0xff]
        %v307 = vld [vmem:[%s230 + $0x160] sm:$0xff]
        %v308 = vld [vmem:[%s230 + $0x168] sm:$0xff]
        %v309 = vld [vmem:[%s230 + $0x170] sm:$0xff]
        %v310 = vld [vmem:[%s230 + $0x178] sm:$0xff]
        %v311 = vld [vmem:[%s230 + $0x180] sm:$0xff]
        %v312 = vld [vmem:[%s230 + $0x188] sm:$0xff]
        %v313 = vld [vmem:[%s230 + $0x190] sm:$0xff]
        %v314 = vld [vmem:[%s230 + $0x198] sm:$0xff]
        %v315 = vld [vmem:[%s230 + $0x1a0] sm:$0xff]
        %v316 = vld [vmem:[%s230 + $0x1a8] sm:$0xff]
        %v317 = vld [vmem:[%s230 + $0x1b0] sm:$0xff]
        %v318 = vld [vmem:[%s230 + $0x1b8] sm:$0xff]
        %v319 = vld [vmem:[%s230 + $0x1c0] sm:$0xff]
        %v320 = vld [vmem:[%s230 + $0x1c8] sm:$0xff]
        %v321 = vld [vmem:[%s230 + $0x1d0] sm:$0xff]
        %v322 = vld [vmem:[%s230 + $0x1d8] sm:$0xff]
        %v323 = vld [vmem:[%s230 + $0x1e0] sm:$0xff]
        %v324 = vld [vmem:[%s230 + $0x1e8] sm:$0xff]
        %v325 = vld [vmem:[%s230 + $0x1f0] sm:$0xff]
        %v326 = vld [vmem:[%s230 + $0x1f8] sm:$0xff]
        %v327 = vld [vmem:[%s230 + $0x200] sm:$0xff]
        %v328 = vld [vmem:[%s230 + $0x208] sm:$0xff]
        %v329 = vld [vmem:[%s230 + $0x210] sm:$0xff]
        %v330 = vld [vmem:[%s230 + $0x218] sm:$0xff]
        %v331 = vld [vmem:[%s230 + $0x220] sm:$0xff]
        %v332 = vld [vmem:[%s230 + $0x228] sm:$0xff]
        %v333 = vld [vmem:[%s230 + $0x230] sm:$0xff]
        %v334 = vld [vmem:[%s230 + $0x238] sm:$0xff]
        %v335 = vld [vmem:[%s230 + $0x240] sm:$0xff]
        %v336 = vld [vmem:[%s230 + $0x248] sm:$0xff]
        %v337 = vld [vmem:[%s230 + $0x250] sm:$0xff]
        %v338 = vld [vmem:[%s230 + $0x258] sm:$0xff]
        %v339 = vld [vmem:[%s230 + $0x260] sm:$0xff]
        %v340 = vld [vmem:[%s230 + $0x268] sm:$0xff]
        %v341 = vld [vmem:[%s230 + $0x270] sm:$0xff]
        %v342 = vld [vmem:[%s230 + $0x278] sm:$0xff]
        %v343 = vld [vmem:[%s230 + $0x280] sm:$0xff]
        %v344 = vld [vmem:[%s230 + $0x288] sm:$0xff]
        %v345 = vld [vmem:[%s230 + $0x290] sm:$0xff]
        %v346 = vld [vmem:[%s230 + $0x298] sm:$0xff]
        %v347 = vld [vmem:[%s230 + $0x2a0] sm:$0xff]
        %v348 = vld [vmem:[%s230 + $0x2a8] sm:$0xff]
        %v349 = vld [vmem:[%s230 + $0x2b0] sm:$0xff]
        %v350 = vld [vmem:[%s230 + $0x2b8] sm:$0xff]
        %v351 = vld [vmem:[%s230 + $0x2c0] sm:$0xff]
        %v352 = vld [vmem:[%s230 + $0x2c8] sm:$0xff]
        %v353 = vld [vmem:[%s230 + $0x2d0] sm:$0xff]
        %v354 = vld [vmem:[%s230 + $0x2d8] sm:$0xff]
        %v355 = vld [vmem:[%s230 + $0x2e0] sm:$0xff]
        %v356 = vld [vmem:[%s230 + $0x2e8] sm:$0xff]
        %v357 = vld [vmem:[%s230 + $0x2f0] sm:$0xff]
        %v358 = vld [vmem:[%s230 + $0x2f8] sm:$0xff]
        %v359 = vld [vmem:[%s230 + $0x300] sm:$0xff]
        %v360 = vld [vmem:[%s230 + $0x308] sm:$0xff]
        %v361 = vld [vmem:[%s230 + $0x310] sm:$0xff]
        %v362 = vld [vmem:[%s230 + $0x318] sm:$0xff]
        %v363 = vld [vmem:[%s230 + $0x320] sm:$0xff]
        %v364 = vld [vmem:[%s230 + $0x328] sm:$0xff]
        %v365 = vld [vmem:[%s230 + $0x330] sm:$0xff]
        %v366 = vld [vmem:[%s230 + $0x338] sm:$0xff]
        %v367 = vld [vmem:[%s230 + $0x340] sm:$0xff]
        %v368 = vld [vmem:[%s230 + $0x348] sm:$0xff]
        %v369 = vld [vmem:[%s230 + $0x350] sm:$0xff]
        %v370 = vld [vmem:[%s230 + $0x358] sm:$0xff]
        %v371 = vld [vmem:[%s230 + $0x360] sm:$0xff]
        %v372 = vld [vmem:[%s230 + $0x368] sm:$0xff]
        %v373 = vld [vmem:[%s230 + $0x370] sm:$0xff]
        %v374 = vld [vmem:[%s230 + $0x378] sm:$0xff]
        %v375 = vld [vmem:[%s230 + $0x380] sm:$0xff]
        %v376 = vld [vmem:[%s230 + $0x388] sm:$0xff]
        %v377 = vld [vmem:[%s230 + $0x390] sm:$0xff]
        %v378 = vld [vmem:[%s230 + $0x398] sm:$0xff]
        %v379 = vld [vmem:[%s230 + $0x3a0] sm:$0xff]
        %v380 = vld [vmem:[%s230 + $0x3a8] sm:$0xff]
        %v381 = vld [vmem:[%s230 + $0x3b0] sm:$0xff]
        %v382 = vld [vmem:[%s230 + $0x3b8] sm:$0xff]
        %v383 = vld [vmem:[%s230 + $0x3c0] sm:$0xff]
        %v384 = vld [vmem:[%s230 + $0x3c8] sm:$0xff]
        %v385 = vld [vmem:[%s230 + $0x3d0] sm:$0xff]
        %v386 = vld [vmem:[%s230 + $0x3d8] sm:$0xff]
        %v387 = vld [vmem:[%s230 + $0x3e0] sm:$0xff]
        %v388 = vld [vmem:[%s230 + $0x3e8] sm:$0xff]
        %v389 = vld [vmem:[%s230 + $0x3f0] sm:$0xff]
        %v390 = vld [vmem:[%s230 + $0x3f8] sm:$0xff]
        %v391 = vld [vmem:[#allocation6] sm:$0xff]
        %v392 = vld [vmem:[#allocation6 + $0x8] sm:$0xff]
        %v393 = vld [vmem:[#allocation6 + $0x10] sm:$0xff]
        %v394 = vld [vmem:[#allocation6 + $0x18] sm:$0xff]
        %v395 = vld [vmem:[#allocation6 + $0x20] sm:$0xff]
        %v396 = vld [vmem:[#allocation6 + $0x28] sm:$0xff]
        %v397 = vld [vmem:[#allocation6 + $0x30] sm:$0xff]
        %v398 = vld [vmem:[#allocation6 + $0x38] sm:$0xff]
        %v399 = vld [vmem:[#allocation6 + $0x40] sm:$0xff]
        %v400 = vld [vmem:[#allocation6 + $0x48] sm:$0xff]
        %v401 = vld [vmem:[#allocation6 + $0x50] sm:$0xff]
        %v402 = vld [vmem:[#allocation6 + $0x58] sm:$0xff]
        %v403 = vld [vmem:[#allocation6 + $0x60] sm:$0xff]
        %v404 = vld [vmem:[#allocation6 + $0x68] sm:$0xff]
        %v405 = vld [vmem:[#allocation6 + $0x70] sm:$0xff]
        %v406 = vld [vmem:[#allocation6 + $0x78] sm:$0xff]
        %v407 = vld [vmem:[#allocation6 + $0x80] sm:$0xff]
        %v408 = vld [vmem:[#allocation6 + $0x88] sm:$0xff]
        %v409 = vld [vmem:[#allocation6 + $0x90] sm:$0xff]
        %v410 = vld [vmem:[#allocation6 + $0x98] sm:$0xff]
        %v411 = vld [vmem:[#allocation6 + $0xa0] sm:$0xff]
        %v412 = vld [vmem:[#allocation6 + $0xa8] sm:$0xff]
        %v413 = vld [vmem:[#allocation6 + $0xb0] sm:$0xff]
        %v414 = vld [vmem:[#allocation6 + $0xb8] sm:$0xff]
        %v415 = vld [vmem:[#allocation6 + $0xc0] sm:$0xff]
        %v416 = vld [vmem:[#allocation6 + $0xc8] sm:$0xff]
        %v417 = vld [vmem:[#allocation6 + $0xd0] sm:$0xff]
        %v418 = vld [vmem:[#allocation6 + $0xd8] sm:$0xff]
        %v419 = vld [vmem:[#allocation6 + $0xe0] sm:$0xff]
        %v420 = vld [vmem:[#allocation6 + $0xe8] sm:$0xff]
        %v421 = vld [vmem:[#allocation6 + $0xf0] sm:$0xff]
        %v422 = vld [vmem:[#allocation6 + $0xf8] sm:$0xff]
        %v423 = vld [vmem:[#allocation6 + $0x100] sm:$0xff]
        %v424 = vld [vmem:[#allocation6 + $0x108] sm:$0xff]
        %v425 = vld [vmem:[#allocation6 + $0x110] sm:$0xff]
        %v426 = vld [vmem:[#allocation6 + $0x118] sm:$0xff]
        %v427 = vld [vmem:[#allocation6 + $0x120] sm:$0xff]
        %v428 = vld [vmem:[#allocation6 + $0x128] sm:$0xff]
        %v429 = vld [vmem:[#allocation6 + $0x130] sm:$0xff]
        %v430 = vld [vmem:[#allocation6 + $0x138] sm:$0xff]
        %v431 = vld [vmem:[#allocation6 + $0x140] sm:$0xff]
        %v432 = vld [vmem:[#allocation6 + $0x148] sm:$0xff]
        %v433 = vld [vmem:[#allocation6 + $0x150] sm:$0xff]
        %v434 = vld [vmem:[#allocation6 + $0x158] sm:$0xff]
        %v435 = vld [vmem:[#allocation6 + $0x160] sm:$0xff]
        %v436 = vld [vmem:[#allocation6 + $0x168] sm:$0xff]
        %v437 = vld [vmem:[#allocation6 + $0x170] sm:$0xff]
        %v438 = vld [vmem:[#allocation6 + $0x178] sm:$0xff]
        %v439 = vld [vmem:[#allocation6 + $0x180] sm:$0xff]
        %v440 = vld [vmem:[#allocation6 + $0x188] sm:$0xff]
        %v441 = vld [vmem:[#allocation6 + $0x190] sm:$0xff]
        %v442 = vld [vmem:[#allocation6 + $0x198] sm:$0xff]
        %v443 = vld [vmem:[#allocation6 + $0x1a0] sm:$0xff]
        %v444 = vld [vmem:[#allocation6 + $0x1a8] sm:$0xff]
        %v445 = vld [vmem:[#allocation6 + $0x1b0] sm:$0xff]
        %v446 = vld [vmem:[#allocation6 + $0x1b8] sm:$0xff]
        %v447 = vld [vmem:[#allocation6 + $0x1c0] sm:$0xff]
        %v448 = vld [vmem:[#allocation6 + $0x1c8] sm:$0xff]
        %v449 = vld [vmem:[#allocation6 + $0x1d0] sm:$0xff]
        %v450 = vld [vmem:[#allocation6 + $0x1d8] sm:$0xff]
        %v451 = vld [vmem:[#allocation6 + $0x1e0] sm:$0xff]
        %v452 = vld [vmem:[#allocation6 + $0x1e8] sm:$0xff]
        %v453 = vld [vmem:[#allocation6 + $0x1f0] sm:$0xff]
        %v454 = vld [vmem:[#allocation6 + $0x1f8] sm:$0xff]
        %v455 = vld [vmem:[#allocation6 + $0x200] sm:$0xff]
        %v456 = vld [vmem:[#allocation6 + $0x208] sm:$0xff]
        %v457 = vld [vmem:[#allocation6 + $0x210] sm:$0xff]
        %v458 = vld [vmem:[#allocation6 + $0x218] sm:$0xff]
        %v459 = vld [vmem:[#allocation6 + $0x220] sm:$0xff]
        %v460 = vld [vmem:[#allocation6 + $0x228] sm:$0xff]
        %v461 = vld [vmem:[#allocation6 + $0x230] sm:$0xff]
        %v462 = vld [vmem:[#allocation6 + $0x238] sm:$0xff]
        %v463 = vld [vmem:[#allocation6 + $0x240] sm:$0xff]
        %v464 = vld [vmem:[#allocation6 + $0x248] sm:$0xff]
        %v465 = vld [vmem:[#allocation6 + $0x250] sm:$0xff]
        %v466 = vld [vmem:[#allocation6 + $0x258] sm:$0xff]
        %v467 = vld [vmem:[#allocation6 + $0x260] sm:$0xff]
        %v468 = vld [vmem:[#allocation6 + $0x268] sm:$0xff]
        %v469 = vld [vmem:[#allocation6 + $0x270] sm:$0xff]
        %v470 = vld [vmem:[#allocation6 + $0x278] sm:$0xff]
        %v471 = vld [vmem:[#allocation6 + $0x280] sm:$0xff]
        %v472 = vld [vmem:[#allocation6 + $0x288] sm:$0xff]
        %v473 = vld [vmem:[#allocation6 + $0x290] sm:$0xff]
        %v474 = vld [vmem:[#allocation6 + $0x298] sm:$0xff]
        %v475 = vld [vmem:[#allocation6 + $0x2a0] sm:$0xff]
        %v476 = vld [vmem:[#allocation6 + $0x2a8] sm:$0xff]
        %v477 = vld [vmem:[#allocation6 + $0x2b0] sm:$0xff]
        %v478 = vld [vmem:[#allocation6 + $0x2b8] sm:$0xff]
        %v479 = vld [vmem:[#allocation6 + $0x2c0] sm:$0xff]
        %v480 = vld [vmem:[#allocation6 + $0x2c8] sm:$0xff]
        %v481 = vld [vmem:[#allocation6 + $0x2d0] sm:$0xff]
        %v482 = vld [vmem:[#allocation6 + $0x2d8] sm:$0xff]
        %v483 = vld [vmem:[#allocation6 + $0x2e0] sm:$0xff]
        %v484 = vld [vmem:[#allocation6 + $0x2e8] sm:$0xff]
        %v485 = vld [vmem:[#allocation6 + $0x2f0] sm:$0xff]
        %v486 = vld [vmem:[#allocation6 + $0x2f8] sm:$0xff]
        %v487 = vld [vmem:[#allocation6 + $0x300] sm:$0xff]
        %v488 = vld [vmem:[#allocation6 + $0x308] sm:$0xff]
        %v489 = vld [vmem:[#allocation6 + $0x310] sm:$0xff]
        %v490 = vld [vmem:[#allocation6 + $0x318] sm:$0xff]
        %v491 = vld [vmem:[#allocation6 + $0x320] sm:$0xff]
        %v492 = vld [vmem:[#allocation6 + $0x328] sm:$0xff]
        %v493 = vld [vmem:[#allocation6 + $0x330] sm:$0xff]
        %v494 = vld [vmem:[#allocation6 + $0x338] sm:$0xff]
        %v495 = vld [vmem:[#allocation6 + $0x340] sm:$0xff]
        %v496 = vld [vmem:[#allocation6 + $0x348] sm:$0xff]
        %v497 = vld [vmem:[#allocation6 + $0x350] sm:$0xff]
        %v498 = vld [vmem:[#allocation6 + $0x358] sm:$0xff]
        %v499 = vld [vmem:[#allocation6 + $0x360] sm:$0xff]
        %v500 = vld [vmem:[#allocation6 + $0x368] sm:$0xff]
        %v501 = vld [vmem:[#allocation6 + $0x370] sm:$0xff]
        %v502 = vld [vmem:[#allocation6 + $0x378] sm:$0xff]
        %v503 = vld [vmem:[#allocation6 + $0x380] sm:$0xff]
        %v504 = vld [vmem:[#allocation6 + $0x388] sm:$0xff]
        %v505 = vld [vmem:[#allocation6 + $0x390] sm:$0xff]
        %v506 = vld [vmem:[#allocation6 + $0x398] sm:$0xff]
        %v507 = vld [vmem:[#allocation6 + $0x3a0] sm:$0xff]
        %v508 = vld [vmem:[#allocation6 + $0x3a8] sm:$0xff]
        %v509 = vld [vmem:[#allocation6 + $0x3b0] sm:$0xff]
        %v510 = vld [vmem:[#allocation6 + $0x3b8] sm:$0xff]
        %v511 = vld [vmem:[#allocation6 + $0x3c0] sm:$0xff]
        %v512 = vld [vmem:[#allocation6 + $0x3c8] sm:$0xff]
        %v513 = vld [vmem:[#allocation6 + $0x3d0] sm:$0xff]
        %v514 = vld [vmem:[#allocation6 + $0x3d8] sm:$0xff]
        %v515 = vld [vmem:[#allocation6 + $0x3e0] sm:$0xff]
        %v516 = vld [vmem:[#allocation6 + $0x3e8] sm:$0xff]
        %v517 = vld [vmem:[#allocation6 + $0x3f0] sm:$0xff]
        %v518 = vld [vmem:[#allocation6 + $0x3f8] sm:$0xff]
        %v519 = vld [vmem:[%s2] sm:$0x3]
        %v521 = vlaneseq
        %v522 = vshrl.u32 %v521, 7
        %v523 = vsub.s32 0, %v522
        %v524 = vrot.slane %v519, %v523
        %v525 = vlaneseq
        %v526 = vshrl.u32 %v525, 7
        %v527 = vsub.s32 1, %v526
        %v528 = vrot.slane %v519, %v527
        %v659 = vunpack.c.l.b16 %v263
        %v660 = vunpack.c.h.b16 %v263
        %v661 = vunpack.c.l.b16 %v264
        %v662 = vunpack.c.h.b16 %v264
        %v663 = vunpack.c.l.b16 %v265
        %v664 = vunpack.c.h.b16 %v265
        %v665 = vunpack.c.l.b16 %v266
        %v666 = vunpack.c.h.b16 %v266
        %v667 = vunpack.c.l.b16 %v267
        %v668 = vunpack.c.h.b16 %v267
        %v669 = vunpack.c.l.b16 %v268
        %v670 = vunpack.c.h.b16 %v268
        %v671 = vunpack.c.l.b16 %v269
        %v672 = vunpack.c.h.b16 %v269
        %v673 = vunpack.c.l.b16 %v270
        %v674 = vunpack.c.h.b16 %v270
        %v675 = vunpack.c.l.b16 %v271
        %v676 = vunpack.c.h.b16 %v271
        %v677 = vunpack.c.l.b16 %v272
        %v678 = vunpack.c.h.b16 %v272
        %v679 = vunpack.c.l.b16 %v273
        %v680 = vunpack.c.h.b16 %v273
        %v681 = vunpack.c.l.b16 %v274
        %v682 = vunpack.c.h.b16 %v274
        %v683 = vunpack.c.l.b16 %v275
        %v684 = vunpack.c.h.b16 %v275
        %v685 = vunpack.c.l.b16 %v276
        %v686 = vunpack.c.h.b16 %v276
        %v687 = vunpack.c.l.b16 %v277
        %v688 = vunpack.c.h.b16 %v277
        %v689 = vunpack.c.l.b16 %v278
        %v690 = vunpack.c.h.b16 %v278
        %v691 = vunpack.c.l.b16 %v279
        %v692 = vunpack.c.h.b16 %v279
        %v693 = vunpack.c.l.b16 %v280
        %v694 = vunpack.c.h.b16 %v280
        %v695 = vunpack.c.l.b16 %v281
        %v696 = vunpack.c.h.b16 %v281
        %v697 = vunpack.c.l.b16 %v282
        %v698 = vunpack.c.h.b16 %v282
        %v699 = vunpack.c.l.b16 %v283
        %v700 = vunpack.c.h.b16 %v283
        %v701 = vunpack.c.l.b16 %v284
        %v702 = vunpack.c.h.b16 %v284
        %v703 = vunpack.c.l.b16 %v285
        %v704 = vunpack.c.h.b16 %v285
        %v705 = vunpack.c.l.b16 %v286
        %v706 = vunpack.c.h.b16 %v286
        %v707 = vunpack.c.l.b16 %v287
        %v708 = vunpack.c.h.b16 %v287
        %v709 = vunpack.c.l.b16 %v288
        %v710 = vunpack.c.h.b16 %v288
        %v711 = vunpack.c.l.b16 %v289
        %v712 = vunpack.c.h.b16 %v289
        %v713 = vunpack.c.l.b16 %v290
        %v714 = vunpack.c.h.b16 %v290
        %v715 = vunpack.c.l.b16 %v291
        %v716 = vunpack.c.h.b16 %v291
        %v717 = vunpack.c.l.b16 %v292
        %v718 = vunpack.c.h.b16 %v292
        %v719 = vunpack.c.l.b16 %v293
        %v720 = vunpack.c.h.b16 %v293
        %v721 = vunpack.c.l.b16 %v294
        %v722 = vunpack.c.h.b16 %v294
        %v723 = vunpack.c.l.b16 %v295
        %v724 = vunpack.c.h.b16 %v295
        %v725 = vunpack.c.l.b16 %v296
        %v726 = vunpack.c.h.b16 %v296
        %v727 = vunpack.c.l.b16 %v297
        %v728 = vunpack.c.h.b16 %v297
        %v729 = vunpack.c.l.b16 %v298
        %v730 = vunpack.c.h.b16 %v298
        %v731 = vunpack.c.l.b16 %v299
        %v732 = vunpack.c.h.b16 %v299
        %v733 = vunpack.c.l.b16 %v300
        %v734 = vunpack.c.h.b16 %v300
        %v735 = vunpack.c.l.b16 %v301
        %v736 = vunpack.c.h.b16 %v301
        %v737 = vunpack.c.l.b16 %v302
        %v738 = vunpack.c.h.b16 %v302
        %v739 = vunpack.c.l.b16 %v303
        %v740 = vunpack.c.h.b16 %v303
        %v741 = vunpack.c.l.b16 %v304
        %v742 = vunpack.c.h.b16 %v304
        %v743 = vunpack.c.l.b16 %v305
        %v744 = vunpack.c.h.b16 %v305
        %v745 = vunpack.c.l.b16 %v306
        %v746 = vunpack.c.h.b16 %v306
        %v747 = vunpack.c.l.b16 %v307
        %v748 = vunpack.c.h.b16 %v307
        %v749 = vunpack.c.l.b16 %v308
        %v750 = vunpack.c.h.b16 %v308
        %v751 = vunpack.c.l.b16 %v309
        %v752 = vunpack.c.h.b16 %v309
        %v753 = vunpack.c.l.b16 %v310
        %v754 = vunpack.c.h.b16 %v310
        %v755 = vunpack.c.l.b16 %v311
        %v756 = vunpack.c.h.b16 %v311
        %v757 = vunpack.c.l.b16 %v312
        %v758 = vunpack.c.h.b16 %v312
        %v759 = vunpack.c.l.b16 %v313
        %v760 = vunpack.c.h.b16 %v313
        %v761 = vunpack.c.l.b16 %v314
        %v762 = vunpack.c.h.b16 %v314
        %v763 = vunpack.c.l.b16 %v315
        %v764 = vunpack.c.h.b16 %v315
        %v765 = vunpack.c.l.b16 %v316
        %v766 = vunpack.c.h.b16 %v316
        %v767 = vunpack.c.l.b16 %v317
        %v768 = vunpack.c.h.b16 %v317
        %v769 = vunpack.c.l.b16 %v318
        %v770 = vunpack.c.h.b16 %v318
        %v771 = vunpack.c.l.b16 %v319
        %v772 = vunpack.c.h.b16 %v319
        %v773 = vunpack.c.l.b16 %v320
        %v774 = vunpack.c.h.b16 %v320
        %v775 = vunpack.c.l.b16 %v321
        %v776 = vunpack.c.h.b16 %v321
        %v777 = vunpack.c.l.b16 %v322
        %v778 = vunpack.c.h.b16 %v322
        %v779 = vunpack.c.l.b16 %v323
        %v780 = vunpack.c.h.b16 %v323
        %v781 = vunpack.c.l.b16 %v324
        %v782 = vunpack.c.h.b16 %v324
        %v783 = vunpack.c.l.b16 %v325
        %v784 = vunpack.c.h.b16 %v325
        %v785 = vunpack.c.l.b16 %v326
        %v786 = vunpack.c.h.b16 %v326
        %v787 = vunpack.c.l.b16 %v327
        %v788 = vunpack.c.h.b16 %v327
        %v789 = vunpack.c.l.b16 %v328
        %v790 = vunpack.c.h.b16 %v328
        %v791 = vunpack.c.l.b16 %v329
        %v792 = vunpack.c.h.b16 %v329
        %v793 = vunpack.c.l.b16 %v330
        %v794 = vunpack.c.h.b16 %v330
        %v795 = vunpack.c.l.b16 %v331
        %v796 = vunpack.c.h.b16 %v331
        %v797 = vunpack.c.l.b16 %v332
        %v798 = vunpack.c.h.b16 %v332
        %v799 = vunpack.c.l.b16 %v333
        %v800 = vunpack.c.h.b16 %v333
        %v801 = vunpack.c.l.b16 %v334
        %v802 = vunpack.c.h.b16 %v334
        %v803 = vunpack.c.l.b16 %v335
        %v804 = vunpack.c.h.b16 %v335
        %v805 = vunpack.c.l.b16 %v336
        %v806 = vunpack.c.h.b16 %v336
        %v807 = vunpack.c.l.b16 %v337
        %v808 = vunpack.c.h.b16 %v337
        %v809 = vunpack.c.l.b16 %v338
        %v810 = vunpack.c.h.b16 %v338
        %v811 = vunpack.c.l.b16 %v339
        %v812 = vunpack.c.h.b16 %v339
        %v813 = vunpack.c.l.b16 %v340
        %v814 = vunpack.c.h.b16 %v340
        %v815 = vunpack.c.l.b16 %v341
        %v816 = vunpack.c.h.b16 %v341
        %v817 = vunpack.c.l.b16 %v342
        %v818 = vunpack.c.h.b16 %v342
        %v819 = vunpack.c.l.b16 %v343
        %v820 = vunpack.c.h.b16 %v343
        %v821 = vunpack.c.l.b16 %v344
        %v822 = vunpack.c.h.b16 %v344
        %v823 = vunpack.c.l.b16 %v345
        %v824 = vunpack.c.h.b16 %v345
        %v825 = vunpack.c.l.b16 %v346
        %v826 = vunpack.c.h.b16 %v346
        %v827 = vunpack.c.l.b16 %v347
        %v828 = vunpack.c.h.b16 %v347
        %v829 = vunpack.c.l.b16 %v348
        %v830 = vunpack.c.h.b16 %v348
        %v831 = vunpack.c.l.b16 %v349
        %v832 = vunpack.c.h.b16 %v349
        %v833 = vunpack.c.l.b16 %v350
        %v834 = vunpack.c.h.b16 %v350
        %v835 = vunpack.c.l.b16 %v351
        %v836 = vunpack.c.h.b16 %v351
        %v837 = vunpack.c.l.b16 %v352
        %v838 = vunpack.c.h.b16 %v352
        %v839 = vunpack.c.l.b16 %v353
        %v840 = vunpack.c.h.b16 %v353
        %v841 = vunpack.c.l.b16 %v354
        %v842 = vunpack.c.h.b16 %v354
        %v843 = vunpack.c.l.b16 %v355
        %v844 = vunpack.c.h.b16 %v355
        %v845 = vunpack.c.l.b16 %v356
        %v846 = vunpack.c.h.b16 %v356
        %v847 = vunpack.c.l.b16 %v357
        %v848 = vunpack.c.h.b16 %v357
        %v849 = vunpack.c.l.b16 %v358
        %v850 = vunpack.c.h.b16 %v358
        %v851 = vunpack.c.l.b16 %v359
        %v852 = vunpack.c.h.b16 %v359
        %v853 = vunpack.c.l.b16 %v360
        %v854 = vunpack.c.h.b16 %v360
        %v855 = vunpack.c.l.b16 %v361
        %v856 = vunpack.c.h.b16 %v361
        %v857 = vunpack.c.l.b16 %v362
        %v858 = vunpack.c.h.b16 %v362
        %v859 = vunpack.c.l.b16 %v363
        %v860 = vunpack.c.h.b16 %v363
        %v861 = vunpack.c.l.b16 %v364
        %v862 = vunpack.c.h.b16 %v364
        %v863 = vunpack.c.l.b16 %v365
        %v864 = vunpack.c.h.b16 %v365
        %v865 = vunpack.c.l.b16 %v366
        %v866 = vunpack.c.h.b16 %v366
        %v867 = vunpack.c.l.b16 %v367
        %v868 = vunpack.c.h.b16 %v367
        %v869 = vunpack.c.l.b16 %v368
        %v870 = vunpack.c.h.b16 %v368
        %v871 = vunpack.c.l.b16 %v369
        %v872 = vunpack.c.h.b16 %v369
        %v873 = vunpack.c.l.b16 %v370
        %v874 = vunpack.c.h.b16 %v370
        %v875 = vunpack.c.l.b16 %v371
        %v876 = vunpack.c.h.b16 %v371
        %v877 = vunpack.c.l.b16 %v372
        %v878 = vunpack.c.h.b16 %v372
        %v879 = vunpack.c.l.b16 %v373
        %v880 = vunpack.c.h.b16 %v373
        %v881 = vunpack.c.l.b16 %v374
        %v882 = vunpack.c.h.b16 %v374
        %v883 = vunpack.c.l.b16 %v375
        %v884 = vunpack.c.h.b16 %v375
        %v885 = vunpack.c.l.b16 %v376
        %v886 = vunpack.c.h.b16 %v376
        %v887 = vunpack.c.l.b16 %v377
        %v888 = vunpack.c.h.b16 %v377
        %v889 = vunpack.c.l.b16 %v378
        %v890 = vunpack.c.h.b16 %v378
        %v891 = vunpack.c.l.b16 %v379
        %v892 = vunpack.c.h.b16 %v379
        %v893 = vunpack.c.l.b16 %v380
        %v894 = vunpack.c.h.b16 %v380
        %v895 = vunpack.c.l.b16 %v381
        %v896 = vunpack.c.h.b16 %v381
        %v897 = vunpack.c.l.b16 %v382
        %v898 = vunpack.c.h.b16 %v382
        %v899 = vunpack.c.l.b16 %v383
        %v900 = vunpack.c.h.b16 %v383
        %v901 = vunpack.c.l.b16 %v384
        %v902 = vunpack.c.h.b16 %v384
        %v903 = vunpack.c.l.b16 %v385
        %v904 = vunpack.c.h.b16 %v385
        %v905 = vunpack.c.l.b16 %v386
        %v906 = vunpack.c.h.b16 %v386
        %v907 = vunpack.c.l.b16 %v387
        %v908 = vunpack.c.h.b16 %v387
        %v909 = vunpack.c.l.b16 %v388
        %v910 = vunpack.c.h.b16 %v388
        %v911 = vunpack.c.l.b16 %v389
        %v912 = vunpack.c.h.b16 %v389
        %v913 = vunpack.c.l.b16 %v390
        %v914 = vunpack.c.h.b16 %v390
        %v915 = vpack.c.b16 %v667, %v659
        %v916 = vpack.c.b16 %v668, %v660
        %v917 = vpack.c.b16 %v669, %v661
        %v918 = vpack.c.b16 %v670, %v662
        %v919 = vpack.c.b16 %v671, %v663
        %v920 = vpack.c.b16 %v672, %v664
        %v921 = vpack.c.b16 %v673, %v665
        %v922 = vpack.c.b16 %v674, %v666
        %v923 = vpack.c.b16 %v683, %v675
        %v924 = vpack.c.b16 %v684, %v676
        %v925 = vpack.c.b16 %v685, %v677
        %v926 = vpack.c.b16 %v686, %v678
        %v927 = vpack.c.b16 %v687, %v679
        %v928 = vpack.c.b16 %v688, %v680
        %v929 = vpack.c.b16 %v689, %v681
        %v930 = vpack.c.b16 %v690, %v682
        %v931 = vpack.c.b16 %v699, %v691
        %v932 = vpack.c.b16 %v700, %v692
        %v933 = vpack.c.b16 %v701, %v693
        %v934 = vpack.c.b16 %v702, %v694
        %v935 = vpack.c.b16 %v703, %v695
        %v936 = vpack.c.b16 %v704, %v696
        %v937 = vpack.c.b16 %v705, %v697
        %v938 = vpack.c.b16 %v706, %v698
        %v939 = vpack.c.b16 %v715, %v707
        %v940 = vpack.c.b16 %v716, %v708
        %v941 = vpack.c.b16 %v717, %v709
        %v942 = vpack.c.b16 %v718, %v710
        %v943 = vpack.c.b16 %v719, %v711
        %v944 = vpack.c.b16 %v720, %v712
        %v945 = vpack.c.b16 %v721, %v713
        %v946 = vpack.c.b16 %v722, %v714
        %v947 = vpack.c.b16 %v731, %v723
        %v948 = vpack.c.b16 %v732, %v724
        %v949 = vpack.c.b16 %v733, %v725
        %v950 = vpack.c.b16 %v734, %v726
        %v951 = vpack.c.b16 %v735, %v727
        %v952 = vpack.c.b16 %v736, %v728
        %v953 = vpack.c.b16 %v737, %v729
        %v954 = vpack.c.b16 %v738, %v730
        %v955 = vpack.c.b16 %v747, %v739
        %v956 = vpack.c.b16 %v748, %v740
        %v957 = vpack.c.b16 %v749, %v741
        %v958 = vpack.c.b16 %v750, %v742
        %v959 = vpack.c.b16 %v751, %v743
        %v960 = vpack.c.b16 %v752, %v744
        %v961 = vpack.c.b16 %v753, %v745
        %v962 = vpack.c.b16 %v754, %v746
        %v963 = vpack.c.b16 %v763, %v755
        %v964 = vpack.c.b16 %v764, %v756
        %v965 = vpack.c.b16 %v765, %v757
        %v966 = vpack.c.b16 %v766, %v758
        %v967 = vpack.c.b16 %v767, %v759
        %v968 = vpack.c.b16 %v768, %v760
        %v969 = vpack.c.b16 %v769, %v761
        %v970 = vpack.c.b16 %v770, %v762
        %v971 = vpack.c.b16 %v779, %v771
        %v972 = vpack.c.b16 %v780, %v772
        %v973 = vpack.c.b16 %v781, %v773
        %v974 = vpack.c.b16 %v782, %v774
        %v975 = vpack.c.b16 %v783, %v775
        %v976 = vpack.c.b16 %v784, %v776
        %v977 = vpack.c.b16 %v785, %v777
        %v978 = vpack.c.b16 %v786, %v778
        %v979 = vpack.c.b16 %v795, %v787
        %v980 = vpack.c.b16 %v796, %v788
        %v981 = vpack.c.b16 %v797, %v789
        %v982 = vpack.c.b16 %v798, %v790
        %v983 = vpack.c.b16 %v799, %v791
        %v984 = vpack.c.b16 %v800, %v792
        %v985 = vpack.c.b16 %v801, %v793
        %v986 = vpack.c.b16 %v802, %v794
        %v987 = vpack.c.b16 %v811, %v803
        %v988 = vpack.c.b16 %v812, %v804
        %v989 = vpack.c.b16 %v813, %v805
        %v990 = vpack.c.b16 %v814, %v806
        %v991 = vpack.c.b16 %v815, %v807
        %v992 = vpack.c.b16 %v816, %v808
        %v993 = vpack.c.b16 %v817, %v809
        %v994 = vpack.c.b16 %v818, %v810
        %v995 = vpack.c.b16 %v827, %v819
        %v996 = vpack.c.b16 %v828, %v820
        %v997 = vpack.c.b16 %v829, %v821
        %v998 = vpack.c.b16 %v830, %v822
        %v999 = vpack.c.b16 %v831, %v823
        %v1000 = vpack.c.b16 %v832, %v824
        %v1001 = vpack.c.b16 %v833, %v825
        %v1002 = vpack.c.b16 %v834, %v826
        %v1003 = vpack.c.b16 %v843, %v835
        %v1004 = vpack.c.b16 %v844, %v836
        %v1005 = vpack.c.b16 %v845, %v837
        %v1006 = vpack.c.b16 %v846, %v838
        %v1007 = vpack.c.b16 %v847, %v839
        %v1008 = vpack.c.b16 %v848, %v840
        %v1009 = vpack.c.b16 %v849, %v841
        %v1010 = vpack.c.b16 %v850, %v842
        %v1011 = vpack.c.b16 %v859, %v851
        %v1012 = vpack.c.b16 %v860, %v852
        %v1013 = vpack.c.b16 %v861, %v853
        %v1014 = vpack.c.b16 %v862, %v854
        %v1015 = vpack.c.b16 %v863, %v855
        %v1016 = vpack.c.b16 %v864, %v856
        %v1017 = vpack.c.b16 %v865, %v857
        %v1018 = vpack.c.b16 %v866, %v858
        %v1019 = vpack.c.b16 %v875, %v867
        %v1020 = vpack.c.b16 %v876, %v868
        %v1021 = vpack.c.b16 %v877, %v869
        %v1022 = vpack.c.b16 %v878, %v870
        %v1023 = vpack.c.b16 %v879, %v871
        %v1024 = vpack.c.b16 %v880, %v872
        %v1025 = vpack.c.b16 %v881, %v873
        %v1026 = vpack.c.b16 %v882, %v874
        %v1027 = vpack.c.b16 %v891, %v883
        %v1028 = vpack.c.b16 %v892, %v884
        %v1029 = vpack.c.b16 %v893, %v885
        %v1030 = vpack.c.b16 %v894, %v886
        %v1031 = vpack.c.b16 %v895, %v887
        %v1032 = vpack.c.b16 %v896, %v888
        %v1033 = vpack.c.b16 %v897, %v889
        %v1034 = vpack.c.b16 %v898, %v890
        %v1035 = vpack.c.b16 %v907, %v899
        %v1036 = vpack.c.b16 %v908, %v900
        %v1037 = vpack.c.b16 %v909, %v901
        %v1038 = vpack.c.b16 %v910, %v902
        %v1039 = vpack.c.b16 %v911, %v903
        %v1040 = vpack.c.b16 %v912, %v904
        %v1041 = vpack.c.b16 %v913, %v905
        %v1042 = vpack.c.b16 %v914, %v906
        %v1299 = vunpack.c.l.b16 %v391
        %v1300 = vunpack.c.h.b16 %v391
        %v1301 = vunpack.c.l.b16 %v392
        %v1302 = vunpack.c.h.b16 %v392
        %v1303 = vunpack.c.l.b16 %v393
        %v1304 = vunpack.c.h.b16 %v393
        %v1305 = vunpack.c.l.b16 %v394
        %v1306 = vunpack.c.h.b16 %v394
        %v1307 = vunpack.c.l.b16 %v395
        %v1308 = vunpack.c.h.b16 %v395
        %v1309 = vunpack.c.l.b16 %v396
        %v1310 = vunpack.c.h.b16 %v396
        %v1311 = vunpack.c.l.b16 %v397
        %v1312 = vunpack.c.h.b16 %v397
        %v1313 = vunpack.c.l.b16 %v398
        %v1314 = vunpack.c.h.b16 %v398
        %v1315 = vunpack.c.l.b16 %v399
        %v1316 = vunpack.c.h.b16 %v399
        %v1317 = vunpack.c.l.b16 %v400
        %v1318 = vunpack.c.h.b16 %v400
        %v1319 = vunpack.c.l.b16 %v401
        %v1320 = vunpack.c.h.b16 %v401
        %v1321 = vunpack.c.l.b16 %v402
        %v1322 = vunpack.c.h.b16 %v402
        %v1323 = vunpack.c.l.b16 %v403
        %v1324 = vunpack.c.h.b16 %v403
        %v1325 = vunpack.c.l.b16 %v404
        %v1326 = vunpack.c.h.b16 %v404
        %v1327 = vunpack.c.l.b16 %v405
        %v1328 = vunpack.c.h.b16 %v405
        %v1329 = vunpack.c.l.b16 %v406
        %v1330 = vunpack.c.h.b16 %v406
        %v1331 = vunpack.c.l.b16 %v407
        %v1332 = vunpack.c.h.b16 %v407
        %v1333 = vunpack.c.l.b16 %v408
        %v1334 = vunpack.c.h.b16 %v408
        %v1335 = vunpack.c.l.b16 %v409
        %v1336 = vunpack.c.h.b16 %v409
        %v1337 = vunpack.c.l.b16 %v410
        %v1338 = vunpack.c.h.b16 %v410
        %v1339 = vunpack.c.l.b16 %v411
        %v1340 = vunpack.c.h.b16 %v411
        %v1341 = vunpack.c.l.b16 %v412
        %v1342 = vunpack.c.h.b16 %v412
        %v1343 = vunpack.c.l.b16 %v413
        %v1344 = vunpack.c.h.b16 %v413
        %v1345 = vunpack.c.l.b16 %v414
        %v1346 = vunpack.c.h.b16 %v414
        %v1347 = vunpack.c.l.b16 %v415
        %v1348 = vunpack.c.h.b16 %v415
        %v1349 = vunpack.c.l.b16 %v416
        %v1350 = vunpack.c.h.b16 %v416
        %v1351 = vunpack.c.l.b16 %v417
        %v1352 = vunpack.c.h.b16 %v417
        %v1353 = vunpack.c.l.b16 %v418
        %v1354 = vunpack.c.h.b16 %v418
        %v1355 = vunpack.c.l.b16 %v419
        %v1356 = vunpack.c.h.b16 %v419
        %v1357 = vunpack.c.l.b16 %v420
        %v1358 = vunpack.c.h.b16 %v420
        %v1359 = vunpack.c.l.b16 %v421
        %v1360 = vunpack.c.h.b16 %v421
        %v1361 = vunpack.c.l.b16 %v422
        %v1362 = vunpack.c.h.b16 %v422
        %v1363 = vunpack.c.l.b16 %v423
        %v1364 = vunpack.c.h.b16 %v423
        %v1365 = vunpack.c.l.b16 %v424
        %v1366 = vunpack.c.h.b16 %v424
        %v1367 = vunpack.c.l.b16 %v425
        %v1368 = vunpack.c.h.b16 %v425
        %v1369 = vunpack.c.l.b16 %v426
        %v1370 = vunpack.c.h.b16 %v426
        %v1371 = vunpack.c.l.b16 %v427
        %v1372 = vunpack.c.h.b16 %v427
        %v1373 = vunpack.c.l.b16 %v428
        %v1374 = vunpack.c.h.b16 %v428
        %v1375 = vunpack.c.l.b16 %v429
        %v1376 = vunpack.c.h.b16 %v429
        %v1377 = vunpack.c.l.b16 %v430
        %v1378 = vunpack.c.h.b16 %v430
        %v1379 = vunpack.c.l.b16 %v431
        %v1380 = vunpack.c.h.b16 %v431
        %v1381 = vunpack.c.l.b16 %v432
        %v1382 = vunpack.c.h.b16 %v432
        %v1383 = vunpack.c.l.b16 %v433
        %v1384 = vunpack.c.h.b16 %v433
        %v1385 = vunpack.c.l.b16 %v434
        %v1386 = vunpack.c.h.b16 %v434
        %v1387 = vunpack.c.l.b16 %v435
        %v1388 = vunpack.c.h.b16 %v435
        %v1389 = vunpack.c.l.b16 %v436
        %v1390 = vunpack.c.h.b16 %v436
        %v1391 = vunpack.c.l.b16 %v437
        %v1392 = vunpack.c.h.b16 %v437
        %v1393 = vunpack.c.l.b16 %v438
        %v1394 = vunpack.c.h.b16 %v438
        %v1395 = vunpack.c.l.b16 %v439
        %v1396 = vunpack.c.h.b16 %v439
        %v1397 = vunpack.c.l.b16 %v440
        %v1398 = vunpack.c.h.b16 %v440
        %v1399 = vunpack.c.l.b16 %v441
        %v1400 = vunpack.c.h.b16 %v441
        %v1401 = vunpack.c.l.b16 %v442
        %v1402 = vunpack.c.h.b16 %v442
        %v1403 = vunpack.c.l.b16 %v443
        %v1404 = vunpack.c.h.b16 %v443
        %v1405 = vunpack.c.l.b16 %v444
        %v1406 = vunpack.c.h.b16 %v444
        %v1407 = vunpack.c.l.b16 %v445
        %v1408 = vunpack.c.h.b16 %v445
        %v1409 = vunpack.c.l.b16 %v446
        %v1410 = vunpack.c.h.b16 %v446
        %v1411 = vunpack.c.l.b16 %v447
        %v1412 = vunpack.c.h.b16 %v447
        %v1413 = vunpack.c.l.b16 %v448
        %v1414 = vunpack.c.h.b16 %v448
        %v1415 = vunpack.c.l.b16 %v449
        %v1416 = vunpack.c.h.b16 %v449
        %v1417 = vunpack.c.l.b16 %v450
        %v1418 = vunpack.c.h.b16 %v450
        %v1419 = vunpack.c.l.b16 %v451
        %v1420 = vunpack.c.h.b16 %v451
        %v1421 = vunpack.c.l.b16 %v452
        %v1422 = vunpack.c.h.b16 %v452
        %v1423 = vunpack.c.l.b16 %v453
        %v1424 = vunpack.c.h.b16 %v453
        %v1425 = vunpack.c.l.b16 %v454
        %v1426 = vunpack.c.h.b16 %v454
        %v1427 = vunpack.c.l.b16 %v455
        %v1428 = vunpack.c.h.b16 %v455
        %v1429 = vunpack.c.l.b16 %v456
        %v1430 = vunpack.c.h.b16 %v456
        %v1431 = vunpack.c.l.b16 %v457
        %v1432 = vunpack.c.h.b16 %v457
        %v1433 = vunpack.c.l.b16 %v458
        %v1434 = vunpack.c.h.b16 %v458
        %v1435 = vunpack.c.l.b16 %v459
        %v1436 = vunpack.c.h.b16 %v459
        %v1437 = vunpack.c.l.b16 %v460
        %v1438 = vunpack.c.h.b16 %v460
        %v1439 = vunpack.c.l.b16 %v461
        %v1440 = vunpack.c.h.b16 %v461
        %v1441 = vunpack.c.l.b16 %v462
        %v1442 = vunpack.c.h.b16 %v462
        %v1443 = vunpack.c.l.b16 %v463
        %v1444 = vunpack.c.h.b16 %v463
        %v1445 = vunpack.c.l.b16 %v464
        %v1446 = vunpack.c.h.b16 %v464
        %v1447 = vunpack.c.l.b16 %v465
        %v1448 = vunpack.c.h.b16 %v465
        %v1449 = vunpack.c.l.b16 %v466
        %v1450 = vunpack.c.h.b16 %v466
        %v1451 = vunpack.c.l.b16 %v467
        %v1452 = vunpack.c.h.b16 %v467
        %v1453 = vunpack.c.l.b16 %v468
        %v1454 = vunpack.c.h.b16 %v468
        %v1455 = vunpack.c.l.b16 %v469
        %v1456 = vunpack.c.h.b16 %v469
        %v1457 = vunpack.c.l.b16 %v470
        %v1458 = vunpack.c.h.b16 %v470
        %v1459 = vunpack.c.l.b16 %v471
        %v1460 = vunpack.c.h.b16 %v471
        %v1461 = vunpack.c.l.b16 %v472
        %v1462 = vunpack.c.h.b16 %v472
        %v1463 = vunpack.c.l.b16 %v473
        %v1464 = vunpack.c.h.b16 %v473
        %v1465 = vunpack.c.l.b16 %v474
        %v1466 = vunpack.c.h.b16 %v474
        %v1467 = vunpack.c.l.b16 %v475
        %v1468 = vunpack.c.h.b16 %v475
        %v1469 = vunpack.c.l.b16 %v476
        %v1470 = vunpack.c.h.b16 %v476
        %v1471 = vunpack.c.l.b16 %v477
        %v1472 = vunpack.c.h.b16 %v477
        %v1473 = vunpack.c.l.b16 %v478
        %v1474 = vunpack.c.h.b16 %v478
        %v1475 = vunpack.c.l.b16 %v479
        %v1476 = vunpack.c.h.b16 %v479
        %v1477 = vunpack.c.l.b16 %v480
        %v1478 = vunpack.c.h.b16 %v480
        %v1479 = vunpack.c.l.b16 %v481
        %v1480 = vunpack.c.h.b16 %v481
        %v1481 = vunpack.c.l.b16 %v482
        %v1482 = vunpack.c.h.b16 %v482
        %v1483 = vunpack.c.l.b16 %v483
        %v1484 = vunpack.c.h.b16 %v483
        %v1485 = vunpack.c.l.b16 %v484
        %v1486 = vunpack.c.h.b16 %v484
        %v1487 = vunpack.c.l.b16 %v485
        %v1488 = vunpack.c.h.b16 %v485
        %v1489 = vunpack.c.l.b16 %v486
        %v1490 = vunpack.c.h.b16 %v486
        %v1491 = vunpack.c.l.b16 %v487
        %v1492 = vunpack.c.h.b16 %v487
        %v1493 = vunpack.c.l.b16 %v488
        %v1494 = vunpack.c.h.b16 %v488
        %v1495 = vunpack.c.l.b16 %v489
        %v1496 = vunpack.c.h.b16 %v489
        %v1497 = vunpack.c.l.b16 %v490
        %v1498 = vunpack.c.h.b16 %v490
        %v1499 = vunpack.c.l.b16 %v491
        %v1500 = vunpack.c.h.b16 %v491
        %v1501 = vunpack.c.l.b16 %v492
        %v1502 = vunpack.c.h.b16 %v492
        %v1503 = vunpack.c.l.b16 %v493
        %v1504 = vunpack.c.h.b16 %v493
        %v1505 = vunpack.c.l.b16 %v494
        %v1506 = vunpack.c.h.b16 %v494
        %v1507 = vunpack.c.l.b16 %v495
        %v1508 = vunpack.c.h.b16 %v495
        %v1509 = vunpack.c.l.b16 %v496
        %v1510 = vunpack.c.h.b16 %v496
        %v1511 = vunpack.c.l.b16 %v497
        %v1512 = vunpack.c.h.b16 %v497
        %v1513 = vunpack.c.l.b16 %v498
        %v1514 = vunpack.c.h.b16 %v498
        %v1515 = vunpack.c.l.b16 %v499
        %v1516 = vunpack.c.h.b16 %v499
        %v1517 = vunpack.c.l.b16 %v500
        %v1518 = vunpack.c.h.b16 %v500
        %v1519 = vunpack.c.l.b16 %v501
        %v1520 = vunpack.c.h.b16 %v501
        %v1521 = vunpack.c.l.b16 %v502
        %v1522 = vunpack.c.h.b16 %v502
        %v1523 = vunpack.c.l.b16 %v503
        %v1524 = vunpack.c.h.b16 %v503
        %v1525 = vunpack.c.l.b16 %v504
        %v1526 = vunpack.c.h.b16 %v504
        %v1527 = vunpack.c.l.b16 %v505
        %v1528 = vunpack.c.h.b16 %v505
        %v1529 = vunpack.c.l.b16 %v506
        %v1530 = vunpack.c.h.b16 %v506
        %v1531 = vunpack.c.l.b16 %v507
        %v1532 = vunpack.c.h.b16 %v507
        %v1533 = vunpack.c.l.b16 %v508
        %v1534 = vunpack.c.h.b16 %v508
        %v1535 = vunpack.c.l.b16 %v509
        %v1536 = vunpack.c.h.b16 %v509
        %v1537 = vunpack.c.l.b16 %v510
        %v1538 = vunpack.c.h.b16 %v510
        %v1539 = vunpack.c.l.b16 %v511
        %v1540 = vunpack.c.h.b16 %v511
        %v1541 = vunpack.c.l.b16 %v512
        %v1542 = vunpack.c.h.b16 %v512
        %v1543 = vunpack.c.l.b16 %v513
        %v1544 = vunpack.c.h.b16 %v513
        %v1545 = vunpack.c.l.b16 %v514
        %v1546 = vunpack.c.h.b16 %v514
        %v1547 = vunpack.c.l.b16 %v515
        %v1548 = vunpack.c.h.b16 %v515
        %v1549 = vunpack.c.l.b16 %v516
        %v1550 = vunpack.c.h.b16 %v516
        %v1551 = vunpack.c.l.b16 %v517
        %v1552 = vunpack.c.h.b16 %v517
        %v1553 = vunpack.c.l.b16 %v518
        %v1554 = vunpack.c.h.b16 %v518
        %v1555 = vpack.c.b16 %v1301, %v1299
        %v1556 = vpack.c.b16 %v1302, %v1300
        %v1557 = vpack.c.b16 %v1305, %v1303
        %v1558 = vpack.c.b16 %v1306, %v1304
        %v1559 = vpack.c.b16 %v1309, %v1307
        %v1560 = vpack.c.b16 %v1310, %v1308
        %v1561 = vpack.c.b16 %v1313, %v1311
        %v1562 = vpack.c.b16 %v1314, %v1312
        %v1563 = vpack.c.b16 %v1317, %v1315
        %v1564 = vpack.c.b16 %v1318, %v1316
        %v1565 = vpack.c.b16 %v1321, %v1319
        %v1566 = vpack.c.b16 %v1322, %v1320
        %v1567 = vpack.c.b16 %v1325, %v1323
        %v1568 = vpack.c.b16 %v1326, %v1324
        %v1569 = vpack.c.b16 %v1329, %v1327
        %v1570 = vpack.c.b16 %v1330, %v1328
        %v1571 = vpack.c.b16 %v1333, %v1331
        %v1572 = vpack.c.b16 %v1334, %v1332
        %v1573 = vpack.c.b16 %v1337, %v1335
        %v1574 = vpack.c.b16 %v1338, %v1336
        %v1575 = vpack.c.b16 %v1341, %v1339
        %v1576 = vpack.c.b16 %v1342, %v1340
        %v1577 = vpack.c.b16 %v1345, %v1343
        %v1578 = vpack.c.b16 %v1346, %v1344
        %v1579 = vpack.c.b16 %v1349, %v1347
        %v1580 = vpack.c.b16 %v1350, %v1348
        %v1581 = vpack.c.b16 %v1353, %v1351
        %v1582 = vpack.c.b16 %v1354, %v1352
        %v1583 = vpack.c.b16 %v1357, %v1355
        %v1584 = vpack.c.b16 %v1358, %v1356
        %v1585 = vpack.c.b16 %v1361, %v1359
        %v1586 = vpack.c.b16 %v1362, %v1360
        %v1587 = vpack.c.b16 %v1365, %v1363
        %v1588 = vpack.c.b16 %v1366, %v1364
        %v1589 = vpack.c.b16 %v1369, %v1367
        %v1590 = vpack.c.b16 %v1370, %v1368
        %v1591 = vpack.c.b16 %v1373, %v1371
        %v1592 = vpack.c.b16 %v1374, %v1372
        %v1593 = vpack.c.b16 %v1377, %v1375
        %v1594 = vpack.c.b16 %v1378, %v1376
        %v1595 = vpack.c.b16 %v1381, %v1379
        %v1596 = vpack.c.b16 %v1382, %v1380
        %v1597 = vpack.c.b16 %v1385, %v1383
        %v1598 = vpack.c.b16 %v1386, %v1384
        %v1599 = vpack.c.b16 %v1389, %v1387
        %v1600 = vpack.c.b16 %v1390, %v1388
        %v1601 = vpack.c.b16 %v1393, %v1391
        %v1602 = vpack.c.b16 %v1394, %v1392
        %v1603 = vpack.c.b16 %v1397, %v1395
        %v1604 = vpack.c.b16 %v1398, %v1396
        %v1605 = vpack.c.b16 %v1401, %v1399
        %v1606 = vpack.c.b16 %v1402, %v1400
        %v1607 = vpack.c.b16 %v1405, %v1403
        %v1608 = vpack.c.b16 %v1406, %v1404
        %v1609 = vpack.c.b16 %v1409, %v1407
        %v1610 = vpack.c.b16 %v1410, %v1408
        %v1611 = vpack.c.b16 %v1413, %v1411
        %v1612 = vpack.c.b16 %v1414, %v1412
        %v1613 = vpack.c.b16 %v1417, %v1415
        %v1614 = vpack.c.b16 %v1418, %v1416
        %v1615 = vpack.c.b16 %v1421, %v1419
        %v1616 = vpack.c.b16 %v1422, %v1420
        %v1617 = vpack.c.b16 %v1425, %v1423
        %v1618 = vpack.c.b16 %v1426, %v1424
        %v1619 = vpack.c.b16 %v1429, %v1427
        %v1620 = vpack.c.b16 %v1430, %v1428
        %v1621 = vpack.c.b16 %v1433, %v1431
        %v1622 = vpack.c.b16 %v1434, %v1432
        %v1623 = vpack.c.b16 %v1437, %v1435
        %v1624 = vpack.c.b16 %v1438, %v1436
        %v1625 = vpack.c.b16 %v1441, %v1439
        %v1626 = vpack.c.b16 %v1442, %v1440
        %v1627 = vpack.c.b16 %v1445, %v1443
        %v1628 = vpack.c.b16 %v1446, %v1444
        %v1629 = vpack.c.b16 %v1449, %v1447
        %v1630 = vpack.c.b16 %v1450, %v1448
        %v1631 = vpack.c.b16 %v1453, %v1451
        %v1632 = vpack.c.b16 %v1454, %v1452
        %v1633 = vpack.c.b16 %v1457, %v1455
        %v1634 = vpack.c.b16 %v1458, %v1456
        %v1635 = vpack.c.b16 %v1461, %v1459
        %v1636 = vpack.c.b16 %v1462, %v1460
        %v1637 = vpack.c.b16 %v1465, %v1463
        %v1638 = vpack.c.b16 %v1466, %v1464
        %v1639 = vpack.c.b16 %v1469, %v1467
        %v1640 = vpack.c.b16 %v1470, %v1468
        %v1641 = vpack.c.b16 %v1473, %v1471
        %v1642 = vpack.c.b16 %v1474, %v1472
        %v1643 = vpack.c.b16 %v1477, %v1475
        %v1644 = vpack.c.b16 %v1478, %v1476
        %v1645 = vpack.c.b16 %v1481, %v1479
        %v1646 = vpack.c.b16 %v1482, %v1480
        %v1647 = vpack.c.b16 %v1485, %v1483
        %v1648 = vpack.c.b16 %v1486, %v1484
        %v1649 = vpack.c.b16 %v1489, %v1487
        %v1650 = vpack.c.b16 %v1490, %v1488
        %v1651 = vpack.c.b16 %v1493, %v1491
        %v1652 = vpack.c.b16 %v1494, %v1492
        %v1653 = vpack.c.b16 %v1497, %v1495
        %v1654 = vpack.c.b16 %v1498, %v1496
        %v1655 = vpack.c.b16 %v1501, %v1499
        %v1656 = vpack.c.b16 %v1502, %v1500
        %v1657 = vpack.c.b16 %v1505, %v1503
        %v1658 = vpack.c.b16 %v1506, %v1504
        %v1659 = vpack.c.b16 %v1509, %v1507
        %v1660 = vpack.c.b16 %v1510, %v1508
        %v1661 = vpack.c.b16 %v1513, %v1511
        %v1662 = vpack.c.b16 %v1514, %v1512
        %v1663 = vpack.c.b16 %v1517, %v1515
        %v1664 = vpack.c.b16 %v1518, %v1516
        %v1665 = vpack.c.b16 %v1521, %v1519
        %v1666 = vpack.c.b16 %v1522, %v1520
        %v1667 = vpack.c.b16 %v1525, %v1523
        %v1668 = vpack.c.b16 %v1526, %v1524
        %v1669 = vpack.c.b16 %v1529, %v1527
        %v1670 = vpack.c.b16 %v1530, %v1528
        %v1671 = vpack.c.b16 %v1533, %v1531
        %v1672 = vpack.c.b16 %v1534, %v1532
        %v1673 = vpack.c.b16 %v1537, %v1535
        %v1674 = vpack.c.b16 %v1538, %v1536
        %v1675 = vpack.c.b16 %v1541, %v1539
        %v1676 = vpack.c.b16 %v1542, %v1540
        %v1677 = vpack.c.b16 %v1545, %v1543
        %v1678 = vpack.c.b16 %v1546, %v1544
        %v1679 = vpack.c.b16 %v1549, %v1547
        %v1680 = vpack.c.b16 %v1550, %v1548
        %v1681 = vpack.c.b16 %v1553, %v1551
        %v1682 = vpack.c.b16 %v1554, %v1552
        %1811 = vmatprep.subr.bf16.mxu0 %v1570
        %1812 = vmatpush1.bf16.msra.mxu0 %v1569
        %1813 = vmatprep.subr.bf16.mxu0 %v1568
        %1814 = vmatpush1.bf16.msra.mxu0 %v1567
        %1815 = vmatprep.subr.bf16.mxu0 %v1566
        %1816 = vmatpush1.bf16.msra.mxu0 %v1565
        %1817 = vmatprep.subr.bf16.mxu0 %v1564
        %1818 = vmatpush1.bf16.msra.mxu0 %v1563
        %1819 = vmatprep.subr.bf16.mxu0 %v1562
        %1820 = vmatpush1.bf16.msra.mxu0 %v1561
        %1821 = vmatprep.subr.bf16.mxu0 %v1560
        %1822 = vmatpush1.bf16.msra.mxu0 %v1559
        %1823 = vmatprep.subr.bf16.mxu0 %v1558
        %1824 = vmatpush1.bf16.msra.mxu0 %v1557
        %1825 = vmatprep.subr.bf16.mxu0 %v1556
        %1826 = vmatpush1.bf16.msra.mxu0 %v1555
        %1827 = vmatprep.subr.bf16.mxu0 %v1586
        %1828 = vmatpush2.bf16.msra.mxu0 %v1585
        %1829 = vmatprep.subr.bf16.mxu0 %v1584
        %1830 = vmatpush2.bf16.msra.mxu0 %v1583
        %1831 = vmatprep.subr.bf16.mxu0 %v1582
        %1832 = vmatpush2.bf16.msra.mxu0 %v1581
        %1833 = vmatprep.subr.bf16.mxu0 %v1580
        %1834 = vmatpush2.bf16.msra.mxu0 %v1579
        %1835 = vmatprep.subr.bf16.mxu0 %v1578
        %1836 = vmatpush2.bf16.msra.mxu0 %v1577
        %1837 = vmatprep.subr.bf16.mxu0 %v1576
        %1838 = vmatpush2.bf16.msra.mxu0 %v1575
        %1839 = vmatprep.subr.bf16.mxu0 %v1574
        %1840 = vmatpush2.bf16.msra.mxu0 %v1573
        %1841 = vmatprep.subr.bf16.mxu0 %v1572
        %1842 = vmatpush2.bf16.msra.mxu0 %v1571
        %1843 = vmatprep.mubr.bf16.mxu0 %v916
        %1844 = vmatmul.mubr.bf16.gmra.mxu0 %v915
        %v1845 = vpop.f32.mrf.mxu0
        %v1846 = vadd.f32 %v524, %v1845
        %v1847 = vpop.f32.mrf.mxu0
        %v1848 = vadd.f32 %v528, %v1847
        %v1849 = vpop.f32.mrf.mxu0
        %v1850 = vadd.f32 %v524, %v1849
        %v1851 = vpop.f32.mrf.mxu0
        %v1852 = vadd.f32 %v528, %v1851
        %1853 = vmatprep.mubr.bf16.mxu0 %v924
        %1854 = vmatmul.mubr.bf16.gmra.mxu0 %v923
        %v1855 = vpop.f32.mrf.mxu0
        %v1856 = vadd.f32 %v524, %v1855
        %v1857 = vpop.f32.mrf.mxu0
        %v1858 = vadd.f32 %v528, %v1857
        %v1859 = vpop.f32.mrf.mxu0
        %v1860 = vadd.f32 %v524, %v1859
        %v1861 = vpop.f32.mrf.mxu0
        %v1862 = vadd.f32 %v528, %v1861
        %1863 = vmatprep.mubr.bf16.mxu0 %v932
        %1864 = vmatmul.mubr.bf16.gmra.mxu0 %v931
        %v1865 = vpop.f32.mrf.mxu0
        %v1866 = vadd.f32 %v524, %v1865
        %v1867 = vpop.f32.mrf.mxu0
        %v1868 = vadd.f32 %v528, %v1867
        %v1869 = vpop.f32.mrf.mxu0
        %v1870 = vadd.f32 %v524, %v1869
        %v1871 = vpop.f32.mrf.mxu0
        %v1872 = vadd.f32 %v528, %v1871
        %1873 = vmatprep.mubr.bf16.mxu0 %v940
        %1874 = vmatmul.mubr.bf16.gmra.mxu0 %v939
        %v1875 = vpop.f32.mrf.mxu0
        %v1876 = vadd.f32 %v524, %v1875
        %v1877 = vpop.f32.mrf.mxu0
        %v1878 = vadd.f32 %v528, %v1877
        %v1879 = vpop.f32.mrf.mxu0
        %v1880 = vadd.f32 %v524, %v1879
        %v1881 = vpop.f32.mrf.mxu0
        %v1882 = vadd.f32 %v528, %v1881
        %1883 = vmatprep.mubr.bf16.mxu0 %v948
        %1884 = vmatmul.mubr.bf16.gmra.mxu0 %v947
        %v1885 = vpop.f32.mrf.mxu0
        %v1886 = vadd.f32 %v524, %v1885
        %v1887 = vpop.f32.mrf.mxu0
        %v1888 = vadd.f32 %v528, %v1887
        %v1889 = vpop.f32.mrf.mxu0
        %v1890 = vadd.f32 %v524, %v1889
        %v1891 = vpop.f32.mrf.mxu0
        %v1892 = vadd.f32 %v528, %v1891
        %1893 = vmatprep.mubr.bf16.mxu0 %v956
        %1894 = vmatmul.mubr.bf16.gmra.mxu0 %v955
        %v1895 = vpop.f32.mrf.mxu0
        %v1896 = vadd.f32 %v524, %v1895
        %v1897 = vpop.f32.mrf.mxu0
        %v1898 = vadd.f32 %v528, %v1897
        %v1899 = vpop.f32.mrf.mxu0
        %v1900 = vadd.f32 %v524, %v1899
        %v1901 = vpop.f32.mrf.mxu0
        %v1902 = vadd.f32 %v528, %v1901
        %1903 = vmatprep.mubr.bf16.mxu0 %v964
        %1904 = vmatmul.mubr.bf16.gmra.mxu0 %v963
        %v1905 = vpop.f32.mrf.mxu0
        %v1906 = vadd.f32 %v524, %v1905
        %v1907 = vpop.f32.mrf.mxu0
        %v1908 = vadd.f32 %v528, %v1907
        %v1909 = vpop.f32.mrf.mxu0
        %v1910 = vadd.f32 %v524, %v1909
        %v1911 = vpop.f32.mrf.mxu0
        %v1912 = vadd.f32 %v528, %v1911
        %1913 = vmatprep.mubr.bf16.mxu0 %v972
        %1914 = vmatmul.mubr.bf16.gmra.mxu0 %v971
        %v1915 = vpop.f32.mrf.mxu0
        %v1916 = vadd.f32 %v524, %v1915
        %v1917 = vpop.f32.mrf.mxu0
        %v1918 = vadd.f32 %v528, %v1917
        %v1919 = vpop.f32.mrf.mxu0
        %v1920 = vadd.f32 %v524, %v1919
        %v1921 = vpop.f32.mrf.mxu0
        %v1922 = vadd.f32 %v528, %v1921
        %1923 = vmatprep.mubr.bf16.mxu0 %v980
        %1924 = vmatmul.mubr.bf16.gmra.mxu0 %v979
        %v1925 = vpop.f32.mrf.mxu0
        %v1926 = vadd.f32 %v524, %v1925
        %v1927 = vpop.f32.mrf.mxu0
        %v1928 = vadd.f32 %v528, %v1927
        %v1929 = vpop.f32.mrf.mxu0
        %v1930 = vadd.f32 %v524, %v1929
        %v1931 = vpop.f32.mrf.mxu0
        %v1932 = vadd.f32 %v528, %v1931
        %1933 = vmatprep.mubr.bf16.mxu0 %v988
        %1934 = vmatmul.mubr.bf16.gmra.mxu0 %v987
        %v1935 = vpop.f32.mrf.mxu0
        %v1936 = vadd.f32 %v524, %v1935
        %v1937 = vpop.f32.mrf.mxu0
        %v1938 = vadd.f32 %v528, %v1937
        %v1939 = vpop.f32.mrf.mxu0
        %v1940 = vadd.f32 %v524, %v1939
        %v1941 = vpop.f32.mrf.mxu0
        %v1942 = vadd.f32 %v528, %v1941
        %1943 = vmatprep.mubr.bf16.mxu0 %v996
        %1944 = vmatmul.mubr.bf16.gmra.mxu0 %v995
        %v1945 = vpop.f32.mrf.mxu0
        %v1946 = vadd.f32 %v524, %v1945
        %v1947 = vpop.f32.mrf.mxu0
        %v1948 = vadd.f32 %v528, %v1947
        %v1949 = vpop.f32.mrf.mxu0
        %v1950 = vadd.f32 %v524, %v1949
        %v1951 = vpop.f32.mrf.mxu0
        %v1952 = vadd.f32 %v528, %v1951
        %1953 = vmatprep.mubr.bf16.mxu0 %v1004
        %1954 = vmatmul.mubr.bf16.gmra.mxu0 %v1003
        %v1955 = vpop.f32.mrf.mxu0
        %v1956 = vadd.f32 %v524, %v1955
        %v1957 = vpop.f32.mrf.mxu0
        %v1958 = vadd.f32 %v528, %v1957
        %v1959 = vpop.f32.mrf.mxu0
        %v1960 = vadd.f32 %v524, %v1959
        %v1961 = vpop.f32.mrf.mxu0
        %v1962 = vadd.f32 %v528, %v1961
        %1963 = vmatprep.mubr.bf16.mxu0 %v1012
        %1964 = vmatmul.mubr.bf16.gmra.mxu0 %v1011
        %v1965 = vpop.f32.mrf.mxu0
        %v1966 = vadd.f32 %v524, %v1965
        %v1967 = vpop.f32.mrf.mxu0
        %v1968 = vadd.f32 %v528, %v1967
        %v1969 = vpop.f32.mrf.mxu0
        %v1970 = vadd.f32 %v524, %v1969
        %v1971 = vpop.f32.mrf.mxu0
        %v1972 = vadd.f32 %v528, %v1971
        %1973 = vmatprep.mubr.bf16.mxu0 %v1020
        %1974 = vmatmul.mubr.bf16.gmra.mxu0 %v1019
        %v1975 = vpop.f32.mrf.mxu0
        %v1976 = vadd.f32 %v524, %v1975
        %v1977 = vpop.f32.mrf.mxu0
        %v1978 = vadd.f32 %v528, %v1977
        %v1979 = vpop.f32.mrf.mxu0
        %v1980 = vadd.f32 %v524, %v1979
        %v1981 = vpop.f32.mrf.mxu0
        %v1982 = vadd.f32 %v528, %v1981
        %1983 = vmatprep.mubr.bf16.mxu0 %v1028
        %1984 = vmatmul.mubr.bf16.gmra.mxu0 %v1027
        %v1985 = vpop.f32.mrf.mxu0
        %v1986 = vadd.f32 %v524, %v1985
        %v1987 = vpop.f32.mrf.mxu0
        %v1988 = vadd.f32 %v528, %v1987
        %v1989 = vpop.f32.mrf.mxu0
        %v1990 = vadd.f32 %v524, %v1989
        %v1991 = vpop.f32.mrf.mxu0
        %v1992 = vadd.f32 %v528, %v1991
        %1993 = vmatprep.mubr.bf16.mxu0 %v1036
        %1994 = vmatmul.mubr.bf16.gmra.mxu0 %v1035
        %v1995 = vpop.f32.mrf.mxu0
        %v1996 = vadd.f32 %v524, %v1995
        %v1997 = vpop.f32.mrf.mxu0
        %v1998 = vadd.f32 %v528, %v1997
        %v1999 = vpop.f32.mrf.mxu0
        %v2000 = vadd.f32 %v524, %v1999
        %v2001 = vpop.f32.mrf.mxu0
        %v2002 = vadd.f32 %v528, %v2001
        %2003 = vdwg.mxu0
        %2004 = vmatprep.subr.bf16.mxu0 %v1602
        %2005 = vmatpush1.bf16.msra.mxu0 %v1601
        %2006 = vmatprep.subr.bf16.mxu0 %v1600
        %2007 = vmatpush1.bf16.msra.mxu0 %v1599
        %2008 = vmatprep.subr.bf16.mxu0 %v1598
        %2009 = vmatpush1.bf16.msra.mxu0 %v1597
        %2010 = vmatprep.subr.bf16.mxu0 %v1596
        %2011 = vmatpush1.bf16.msra.mxu0 %v1595
        %2012 = vmatprep.subr.bf16.mxu0 %v1594
        %2013 = vmatpush1.bf16.msra.mxu0 %v1593
        %2014 = vmatprep.subr.bf16.mxu0 %v1592
        %2015 = vmatpush1.bf16.msra.mxu0 %v1591
        %2016 = vmatprep.subr.bf16.mxu0 %v1590
        %2017 = vmatpush1.bf16.msra.mxu0 %v1589
        %2018 = vmatprep.subr.bf16.mxu0 %v1588
        %2019 = vmatpush1.bf16.msra.mxu0 %v1587
        %2020 = vmatprep.subr.bf16.mxu0 %v1618
        %2021 = vmatpush2.bf16.msra.mxu0 %v1617
        %2022 = vmatprep.subr.bf16.mxu0 %v1616
        %2023 = vmatpush2.bf16.msra.mxu0 %v1615
        %2024 = vmatprep.subr.bf16.mxu0 %v1614
        %2025 = vmatpush2.bf16.msra.mxu0 %v1613
        %2026 = vmatprep.subr.bf16.mxu0 %v1612
        %2027 = vmatpush2.bf16.msra.mxu0 %v1611
        %2028 = vmatprep.subr.bf16.mxu0 %v1610
        %2029 = vmatpush2.bf16.msra.mxu0 %v1609
        %2030 = vmatprep.subr.bf16.mxu0 %v1608
        %2031 = vmatpush2.bf16.msra.mxu0 %v1607
        %2032 = vmatprep.subr.bf16.mxu0 %v1606
        %2033 = vmatpush2.bf16.msra.mxu0 %v1605
        %2034 = vmatprep.subr.bf16.mxu0 %v1604
        %2035 = vmatpush2.bf16.msra.mxu0 %v1603
        %2036 = vmatprep.mubr.bf16.mxu0 %v918
        %2037 = vmatmul.mubr.bf16.gmra.mxu0 %v917
        %v2038 = vpop.f32.mrf.mxu0
        %v2039 = vadd.f32 %v1846, %v2038
        %v2040 = vpop.f32.mrf.mxu0
        %v2041 = vadd.f32 %v1848, %v2040
        %v2042 = vpop.f32.mrf.mxu0
        %v2043 = vadd.f32 %v1850, %v2042
        %v2044 = vpop.f32.mrf.mxu0
        %v2045 = vadd.f32 %v1852, %v2044
        %2046 = vmatprep.mubr.bf16.mxu0 %v926
        %2047 = vmatmul.mubr.bf16.gmra.mxu0 %v925
        %v2048 = vpop.f32.mrf.mxu0
        %v2049 = vadd.f32 %v1856, %v2048
        %v2050 = vpop.f32.mrf.mxu0
        %v2051 = vadd.f32 %v1858, %v2050
        %v2052 = vpop.f32.mrf.mxu0
        %v2053 = vadd.f32 %v1860, %v2052
        %v2054 = vpop.f32.mrf.mxu0
        %v2055 = vadd.f32 %v1862, %v2054
        %2056 = vmatprep.mubr.bf16.mxu0 %v934
        %2057 = vmatmul.mubr.bf16.gmra.mxu0 %v933
        %v2058 = vpop.f32.mrf.mxu0
        %v2059 = vadd.f32 %v1866, %v2058
        %v2060 = vpop.f32.mrf.mxu0
        %v2061 = vadd.f32 %v1868, %v2060
        %v2062 = vpop.f32.mrf.mxu0
        %v2063 = vadd.f32 %v1870, %v2062
        %v2064 = vpop.f32.mrf.mxu0
        %v2065 = vadd.f32 %v1872, %v2064
        %2066 = vmatprep.mubr.bf16.mxu0 %v942
        %2067 = vmatmul.mubr.bf16.gmra.mxu0 %v941
        %v2068 = vpop.f32.mrf.mxu0
        %v2069 = vadd.f32 %v1876, %v2068
        %v2070 = vpop.f32.mrf.mxu0
        %v2071 = vadd.f32 %v1878, %v2070
        %v2072 = vpop.f32.mrf.mxu0
        %v2073 = vadd.f32 %v1880, %v2072
        %v2074 = vpop.f32.mrf.mxu0
        %v2075 = vadd.f32 %v1882, %v2074
        %2076 = vmatprep.mubr.bf16.mxu0 %v950
        %2077 = vmatmul.mubr.bf16.gmra.mxu0 %v949
        %v2078 = vpop.f32.mrf.mxu0
        %v2079 = vadd.f32 %v1886, %v2078
        %v2080 = vpop.f32.mrf.mxu0
        %v2081 = vadd.f32 %v1888, %v2080
        %v2082 = vpop.f32.mrf.mxu0
        %v2083 = vadd.f32 %v1890, %v2082
        %v2084 = vpop.f32.mrf.mxu0
        %v2085 = vadd.f32 %v1892, %v2084
        %2086 = vmatprep.mubr.bf16.mxu0 %v958
        %2087 = vmatmul.mubr.bf16.gmra.mxu0 %v957
        %v2088 = vpop.f32.mrf.mxu0
        %v2089 = vadd.f32 %v1896, %v2088
        %v2090 = vpop.f32.mrf.mxu0
        %v2091 = vadd.f32 %v1898, %v2090
        %v2092 = vpop.f32.mrf.mxu0
        %v2093 = vadd.f32 %v1900, %v2092
        %v2094 = vpop.f32.mrf.mxu0
        %v2095 = vadd.f32 %v1902, %v2094
        %2096 = vmatprep.mubr.bf16.mxu0 %v966
        %2097 = vmatmul.mubr.bf16.gmra.mxu0 %v965
        %v2098 = vpop.f32.mrf.mxu0
        %v2099 = vadd.f32 %v1906, %v2098
        %v2100 = vpop.f32.mrf.mxu0
        %v2101 = vadd.f32 %v1908, %v2100
        %v2102 = vpop.f32.mrf.mxu0
        %v2103 = vadd.f32 %v1910, %v2102
        %v2104 = vpop.f32.mrf.mxu0
        %v2105 = vadd.f32 %v1912, %v2104
        %2106 = vmatprep.mubr.bf16.mxu0 %v974
        %2107 = vmatmul.mubr.bf16.gmra.mxu0 %v973
        %v2108 = vpop.f32.mrf.mxu0
        %v2109 = vadd.f32 %v1916, %v2108
        %v2110 = vpop.f32.mrf.mxu0
        %v2111 = vadd.f32 %v1918, %v2110
        %v2112 = vpop.f32.mrf.mxu0
        %v2113 = vadd.f32 %v1920, %v2112
        %v2114 = vpop.f32.mrf.mxu0
        %v2115 = vadd.f32 %v1922, %v2114
        %2116 = vmatprep.mubr.bf16.mxu0 %v982
        %2117 = vmatmul.mubr.bf16.gmra.mxu0 %v981
        %v2118 = vpop.f32.mrf.mxu0
        %v2119 = vadd.f32 %v1926, %v2118
        %v2120 = vpop.f32.mrf.mxu0
        %v2121 = vadd.f32 %v1928, %v2120
        %v2122 = vpop.f32.mrf.mxu0
        %v2123 = vadd.f32 %v1930, %v2122
        %v2124 = vpop.f32.mrf.mxu0
        %v2125 = vadd.f32 %v1932, %v2124
        %2126 = vmatprep.mubr.bf16.mxu0 %v990
        %2127 = vmatmul.mubr.bf16.gmra.mxu0 %v989
        %v2128 = vpop.f32.mrf.mxu0
        %v2129 = vadd.f32 %v1936, %v2128
        %v2130 = vpop.f32.mrf.mxu0
        %v2131 = vadd.f32 %v1938, %v2130
        %v2132 = vpop.f32.mrf.mxu0
        %v2133 = vadd.f32 %v1940, %v2132
        %v2134 = vpop.f32.mrf.mxu0
        %v2135 = vadd.f32 %v1942, %v2134
        %2136 = vmatprep.mubr.bf16.mxu0 %v998
        %2137 = vmatmul.mubr.bf16.gmra.mxu0 %v997
        %v2138 = vpop.f32.mrf.mxu0
        %v2139 = vadd.f32 %v1946, %v2138
        %v2140 = vpop.f32.mrf.mxu0
        %v2141 = vadd.f32 %v1948, %v2140
        %v2142 = vpop.f32.mrf.mxu0
        %v2143 = vadd.f32 %v1950, %v2142
        %v2144 = vpop.f32.mrf.mxu0
        %v2145 = vadd.f32 %v1952, %v2144
        %2146 = vmatprep.mubr.bf16.mxu0 %v1006
        %2147 = vmatmul.mubr.bf16.gmra.mxu0 %v1005
        %v2148 = vpop.f32.mrf.mxu0
        %v2149 = vadd.f32 %v1956, %v2148
        %v2150 = vpop.f32.mrf.mxu0
        %v2151 = vadd.f32 %v1958, %v2150
        %v2152 = vpop.f32.mrf.mxu0
        %v2153 = vadd.f32 %v1960, %v2152
        %v2154 = vpop.f32.mrf.mxu0
        %v2155 = vadd.f32 %v1962, %v2154
        %2156 = vmatprep.mubr.bf16.mxu0 %v1014
        %2157 = vmatmul.mubr.bf16.gmra.mxu0 %v1013
        %v2158 = vpop.f32.mrf.mxu0
        %v2159 = vadd.f32 %v1966, %v2158
        %v2160 = vpop.f32.mrf.mxu0
        %v2161 = vadd.f32 %v1968, %v2160
        %v2162 = vpop.f32.mrf.mxu0
        %v2163 = vadd.f32 %v1970, %v2162
        %v2164 = vpop.f32.mrf.mxu0
        %v2165 = vadd.f32 %v1972, %v2164
        %2166 = vmatprep.mubr.bf16.mxu0 %v1022
        %2167 = vmatmul.mubr.bf16.gmra.mxu0 %v1021
        %v2168 = vpop.f32.mrf.mxu0
        %v2169 = vadd.f32 %v1976, %v2168
        %v2170 = vpop.f32.mrf.mxu0
        %v2171 = vadd.f32 %v1978, %v2170
        %v2172 = vpop.f32.mrf.mxu0
        %v2173 = vadd.f32 %v1980, %v2172
        %v2174 = vpop.f32.mrf.mxu0
        %v2175 = vadd.f32 %v1982, %v2174
        %2176 = vmatprep.mubr.bf16.mxu0 %v1030
        %2177 = vmatmul.mubr.bf16.gmra.mxu0 %v1029
        %v2178 = vpop.f32.mrf.mxu0
        %v2179 = vadd.f32 %v1986, %v2178
        %v2180 = vpop.f32.mrf.mxu0
        %v2181 = vadd.f32 %v1988, %v2180
        %v2182 = vpop.f32.mrf.mxu0
        %v2183 = vadd.f32 %v1990, %v2182
        %v2184 = vpop.f32.mrf.mxu0
        %v2185 = vadd.f32 %v1992, %v2184
        %2186 = vmatprep.mubr.bf16.mxu0 %v1038
        %2187 = vmatmul.mubr.bf16.gmra.mxu0 %v1037
        %v2188 = vpop.f32.mrf.mxu0
        %v2189 = vadd.f32 %v1996, %v2188
        %v2190 = vpop.f32.mrf.mxu0
        %v2191 = vadd.f32 %v1998, %v2190
        %v2192 = vpop.f32.mrf.mxu0
        %v2193 = vadd.f32 %v2000, %v2192
        %v2194 = vpop.f32.mrf.mxu0
        %v2195 = vadd.f32 %v2002, %v2194
        %2196 = vdwg.mxu0
        %2197 = vmatprep.subr.bf16.mxu0 %v1634
        %2198 = vmatpush1.bf16.msra.mxu0 %v1633
        %2199 = vmatprep.subr.bf16.mxu0 %v1632
        %2200 = vmatpush1.bf16.msra.mxu0 %v1631
        %2201 = vmatprep.subr.bf16.mxu0 %v1630
        %2202 = vmatpush1.bf16.msra.mxu0 %v1629
        %2203 = vmatprep.subr.bf16.mxu0 %v1628
        %2204 = vmatpush1.bf16.msra.mxu0 %v1627
        %2205 = vmatprep.subr.bf16.mxu0 %v1626
        %2206 = vmatpush1.bf16.msra.mxu0 %v1625
        %2207 = vmatprep.subr.bf16.mxu0 %v1624
        %2208 = vmatpush1.bf16.msra.mxu0 %v1623
        %2209 = vmatprep.subr.bf16.mxu0 %v1622
        %2210 = vmatpush1.bf16.msra.mxu0 %v1621
        %2211 = vmatprep.subr.bf16.mxu0 %v1620
        %2212 = vmatpush1.bf16.msra.mxu0 %v1619
        %2213 = vmatprep.subr.bf16.mxu0 %v1650
        %2214 = vmatpush2.bf16.msra.mxu0 %v1649
        %2215 = vmatprep.subr.bf16.mxu0 %v1648
        %2216 = vmatpush2.bf16.msra.mxu0 %v1647
        %2217 = vmatprep.subr.bf16.mxu0 %v1646
        %2218 = vmatpush2.bf16.msra.mxu0 %v1645
        %2219 = vmatprep.subr.bf16.mxu0 %v1644
        %2220 = vmatpush2.bf16.msra.mxu0 %v1643
        %2221 = vmatprep.subr.bf16.mxu0 %v1642
        %2222 = vmatpush2.bf16.msra.mxu0 %v1641
        %2223 = vmatprep.subr.bf16.mxu0 %v1640
        %2224 = vmatpush2.bf16.msra.mxu0 %v1639
        %2225 = vmatprep.subr.bf16.mxu0 %v1638
        %2226 = vmatpush2.bf16.msra.mxu0 %v1637
        %2227 = vmatprep.subr.bf16.mxu0 %v1636
        %2228 = vmatpush2.bf16.msra.mxu0 %v1635
        %2229 = vmatprep.mubr.bf16.mxu0 %v920
        %2230 = vmatmul.mubr.bf16.gmra.mxu0 %v919
        %v2231 = vpop.f32.mrf.mxu0
        %v2232 = vadd.f32 %v2039, %v2231
        %v2233 = vpop.f32.mrf.mxu0
        %v2234 = vadd.f32 %v2041, %v2233
        %v2235 = vpop.f32.mrf.mxu0
        %v2236 = vadd.f32 %v2043, %v2235
        %v2237 = vpop.f32.mrf.mxu0
        %v2238 = vadd.f32 %v2045, %v2237
        %2239 = vmatprep.mubr.bf16.mxu0 %v928
        %2240 = vmatmul.mubr.bf16.gmra.mxu0 %v927
        %v2241 = vpop.f32.mrf.mxu0
        %v2242 = vadd.f32 %v2049, %v2241
        %v2243 = vpop.f32.mrf.mxu0
        %v2244 = vadd.f32 %v2051, %v2243
        %v2245 = vpop.f32.mrf.mxu0
        %v2246 = vadd.f32 %v2053, %v2245
        %v2247 = vpop.f32.mrf.mxu0
        %v2248 = vadd.f32 %v2055, %v2247
        %2249 = vmatprep.mubr.bf16.mxu0 %v936
        %2250 = vmatmul.mubr.bf16.gmra.mxu0 %v935
        %v2251 = vpop.f32.mrf.mxu0
        %v2252 = vadd.f32 %v2059, %v2251
        %v2253 = vpop.f32.mrf.mxu0
        %v2254 = vadd.f32 %v2061, %v2253
        %v2255 = vpop.f32.mrf.mxu0
        %v2256 = vadd.f32 %v2063, %v2255
        %v2257 = vpop.f32.mrf.mxu0
        %v2258 = vadd.f32 %v2065, %v2257
        %2259 = vmatprep.mubr.bf16.mxu0 %v944
        %2260 = vmatmul.mubr.bf16.gmra.mxu0 %v943
        %v2261 = vpop.f32.mrf.mxu0
        %v2262 = vadd.f32 %v2069, %v2261
        %v2263 = vpop.f32.mrf.mxu0
        %v2264 = vadd.f32 %v2071, %v2263
        %v2265 = vpop.f32.mrf.mxu0
        %v2266 = vadd.f32 %v2073, %v2265
        %v2267 = vpop.f32.mrf.mxu0
        %v2268 = vadd.f32 %v2075, %v2267
        %2269 = vmatprep.mubr.bf16.mxu0 %v952
        %2270 = vmatmul.mubr.bf16.gmra.mxu0 %v951
        %v2271 = vpop.f32.mrf.mxu0
        %v2272 = vadd.f32 %v2079, %v2271
        %v2273 = vpop.f32.mrf.mxu0
        %v2274 = vadd.f32 %v2081, %v2273
        %v2275 = vpop.f32.mrf.mxu0
        %v2276 = vadd.f32 %v2083, %v2275
        %v2277 = vpop.f32.mrf.mxu0
        %v2278 = vadd.f32 %v2085, %v2277
        %2279 = vmatprep.mubr.bf16.mxu0 %v960
        %2280 = vmatmul.mubr.bf16.gmra.mxu0 %v959
        %v2281 = vpop.f32.mrf.mxu0
        %v2282 = vadd.f32 %v2089, %v2281
        %v2283 = vpop.f32.mrf.mxu0
        %v2284 = vadd.f32 %v2091, %v2283
        %v2285 = vpop.f32.mrf.mxu0
        %v2286 = vadd.f32 %v2093, %v2285
        %v2287 = vpop.f32.mrf.mxu0
        %v2288 = vadd.f32 %v2095, %v2287
        %2289 = vmatprep.mubr.bf16.mxu0 %v968
        %2290 = vmatmul.mubr.bf16.gmra.mxu0 %v967
        %v2291 = vpop.f32.mrf.mxu0
        %v2292 = vadd.f32 %v2099, %v2291
        %v2293 = vpop.f32.mrf.mxu0
        %v2294 = vadd.f32 %v2101, %v2293
        %v2295 = vpop.f32.mrf.mxu0
        %v2296 = vadd.f32 %v2103, %v2295
        %v2297 = vpop.f32.mrf.mxu0
        %v2298 = vadd.f32 %v2105, %v2297
        %2299 = vmatprep.mubr.bf16.mxu0 %v976
        %2300 = vmatmul.mubr.bf16.gmra.mxu0 %v975
        %v2301 = vpop.f32.mrf.mxu0
        %v2302 = vadd.f32 %v2109, %v2301
        %v2303 = vpop.f32.mrf.mxu0
        %v2304 = vadd.f32 %v2111, %v2303
        %v2305 = vpop.f32.mrf.mxu0
        %v2306 = vadd.f32 %v2113, %v2305
        %v2307 = vpop.f32.mrf.mxu0
        %v2308 = vadd.f32 %v2115, %v2307
        %2309 = vmatprep.mubr.bf16.mxu0 %v984
        %2310 = vmatmul.mubr.bf16.gmra.mxu0 %v983
        %v2311 = vpop.f32.mrf.mxu0
        %v2312 = vadd.f32 %v2119, %v2311
        %v2313 = vpop.f32.mrf.mxu0
        %v2314 = vadd.f32 %v2121, %v2313
        %v2315 = vpop.f32.mrf.mxu0
        %v2316 = vadd.f32 %v2123, %v2315
        %v2317 = vpop.f32.mrf.mxu0
        %v2318 = vadd.f32 %v2125, %v2317
        %2319 = vmatprep.mubr.bf16.mxu0 %v992
        %2320 = vmatmul.mubr.bf16.gmra.mxu0 %v991
        %v2321 = vpop.f32.mrf.mxu0
        %v2322 = vadd.f32 %v2129, %v2321
        %v2323 = vpop.f32.mrf.mxu0
        %v2324 = vadd.f32 %v2131, %v2323
        %v2325 = vpop.f32.mrf.mxu0
        %v2326 = vadd.f32 %v2133, %v2325
        %v2327 = vpop.f32.mrf.mxu0
        %v2328 = vadd.f32 %v2135, %v2327
        %2329 = vmatprep.mubr.bf16.mxu0 %v1000
        %2330 = vmatmul.mubr.bf16.gmra.mxu0 %v999
        %v2331 = vpop.f32.mrf.mxu0
        %v2332 = vadd.f32 %v2139, %v2331
        %v2333 = vpop.f32.mrf.mxu0
        %v2334 = vadd.f32 %v2141, %v2333
        %v2335 = vpop.f32.mrf.mxu0
        %v2336 = vadd.f32 %v2143, %v2335
        %v2337 = vpop.f32.mrf.mxu0
        %v2338 = vadd.f32 %v2145, %v2337
        %2339 = vmatprep.mubr.bf16.mxu0 %v1008
        %2340 = vmatmul.mubr.bf16.gmra.mxu0 %v1007
        %v2341 = vpop.f32.mrf.mxu0
        %v2342 = vadd.f32 %v2149, %v2341
        %v2343 = vpop.f32.mrf.mxu0
        %v2344 = vadd.f32 %v2151, %v2343
        %v2345 = vpop.f32.mrf.mxu0
        %v2346 = vadd.f32 %v2153, %v2345
        %v2347 = vpop.f32.mrf.mxu0
        %v2348 = vadd.f32 %v2155, %v2347
        %2349 = vmatprep.mubr.bf16.mxu0 %v1016
        %2350 = vmatmul.mubr.bf16.gmra.mxu0 %v1015
        %v2351 = vpop.f32.mrf.mxu0
        %v2352 = vadd.f32 %v2159, %v2351
        %v2353 = vpop.f32.mrf.mxu0
        %v2354 = vadd.f32 %v2161, %v2353
        %v2355 = vpop.f32.mrf.mxu0
        %v2356 = vadd.f32 %v2163, %v2355
        %v2357 = vpop.f32.mrf.mxu0
        %v2358 = vadd.f32 %v2165, %v2357
        %2359 = vmatprep.mubr.bf16.mxu0 %v1024
        %2360 = vmatmul.mubr.bf16.gmra.mxu0 %v1023
        %v2361 = vpop.f32.mrf.mxu0
        %v2362 = vadd.f32 %v2169, %v2361
        %v2363 = vpop.f32.mrf.mxu0
        %v2364 = vadd.f32 %v2171, %v2363
        %v2365 = vpop.f32.mrf.mxu0
        %v2366 = vadd.f32 %v2173, %v2365
        %v2367 = vpop.f32.mrf.mxu0
        %v2368 = vadd.f32 %v2175, %v2367
        %2369 = vmatprep.mubr.bf16.mxu0 %v1032
        %2370 = vmatmul.mubr.bf16.gmra.mxu0 %v1031
        %v2371 = vpop.f32.mrf.mxu0
        %v2372 = vadd.f32 %v2179, %v2371
        %v2373 = vpop.f32.mrf.mxu0
        %v2374 = vadd.f32 %v2181, %v2373
        %v2375 = vpop.f32.mrf.mxu0
        %v2376 = vadd.f32 %v2183, %v2375
        %v2377 = vpop.f32.mrf.mxu0
        %v2378 = vadd.f32 %v2185, %v2377
        %2379 = vmatprep.mubr.bf16.mxu0 %v1040
        %2380 = vmatmul.mubr.bf16.gmra.mxu0 %v1039
        %v2381 = vpop.f32.mrf.mxu0
        %v2382 = vadd.f32 %v2189, %v2381
        %v2383 = vpop.f32.mrf.mxu0
        %v2384 = vadd.f32 %v2191, %v2383
        %v2385 = vpop.f32.mrf.mxu0
        %v2386 = vadd.f32 %v2193, %v2385
        %v2387 = vpop.f32.mrf.mxu0
        %v2388 = vadd.f32 %v2195, %v2387
        %2389 = vdwg.mxu0
        %2390 = vmatprep.subr.bf16.mxu0 %v1666
        %2391 = vmatpush1.bf16.msra.mxu0 %v1665
        %2392 = vmatprep.subr.bf16.mxu0 %v1664
        %2393 = vmatpush1.bf16.msra.mxu0 %v1663
        %2394 = vmatprep.subr.bf16.mxu0 %v1662
        %2395 = vmatpush1.bf16.msra.mxu0 %v1661
        %2396 = vmatprep.subr.bf16.mxu0 %v1660
        %2397 = vmatpush1.bf16.msra.mxu0 %v1659
        %2398 = vmatprep.subr.bf16.mxu0 %v1658
        %2399 = vmatpush1.bf16.msra.mxu0 %v1657
        %2400 = vmatprep.subr.bf16.mxu0 %v1656
        %2401 = vmatpush1.bf16.msra.mxu0 %v1655
        %2402 = vmatprep.subr.bf16.mxu0 %v1654
        %2403 = vmatpush1.bf16.msra.mxu0 %v1653
        %2404 = vmatprep.subr.bf16.mxu0 %v1652
        %2405 = vmatpush1.bf16.msra.mxu0 %v1651
        %2406 = vmatprep.subr.bf16.mxu0 %v1682
        %2407 = vmatpush2.bf16.msra.mxu0 %v1681
        %2408 = vmatprep.subr.bf16.mxu0 %v1680
        %2409 = vmatpush2.bf16.msra.mxu0 %v1679
        %2410 = vmatprep.subr.bf16.mxu0 %v1678
        %2411 = vmatpush2.bf16.msra.mxu0 %v1677
        %2412 = vmatprep.subr.bf16.mxu0 %v1676
        %2413 = vmatpush2.bf16.msra.mxu0 %v1675
        %2414 = vmatprep.subr.bf16.mxu0 %v1674
        %2415 = vmatpush2.bf16.msra.mxu0 %v1673
        %2416 = vmatprep.subr.bf16.mxu0 %v1672
        %2417 = vmatpush2.bf16.msra.mxu0 %v1671
        %2418 = vmatprep.subr.bf16.mxu0 %v1670
        %2419 = vmatpush2.bf16.msra.mxu0 %v1669
        %2420 = vmatprep.subr.bf16.mxu0 %v1668
        %2421 = vmatpush2.bf16.msra.mxu0 %v1667
        %2422 = vmatprep.mubr.bf16.mxu0 %v922
        %2423 = vmatmul.mubr.bf16.gmra.mxu0 %v921
        %v2424 = vpop.f32.mrf.mxu0
        %v2425 = vadd.f32 %v2232, %v2424
        %v2426 = vpop.f32.mrf.mxu0
        %v2427 = vadd.f32 %v2234, %v2426
        %v2428 = vpop.f32.mrf.mxu0
        %v2429 = vadd.f32 %v2236, %v2428
        %v2430 = vpop.f32.mrf.mxu0
        %v2431 = vadd.f32 %v2238, %v2430
        %2432 = vmatprep.mubr.bf16.mxu0 %v930
        %2433 = vmatmul.mubr.bf16.gmra.mxu0 %v929
        %v2434 = vpop.f32.mrf.mxu0
        %v2435 = vadd.f32 %v2242, %v2434
        %v2436 = vpop.f32.mrf.mxu0
        %v2437 = vadd.f32 %v2244, %v2436
        %v2438 = vpop.f32.mrf.mxu0
        %v2439 = vadd.f32 %v2246, %v2438
        %v2440 = vpop.f32.mrf.mxu0
        %v2441 = vadd.f32 %v2248, %v2440
        %2442 = vmatprep.mubr.bf16.mxu0 %v938
        %2443 = vmatmul.mubr.bf16.gmra.mxu0 %v937
        %v2444 = vpop.f32.mrf.mxu0
        %v2445 = vadd.f32 %v2252, %v2444
        %v2446 = vpop.f32.mrf.mxu0
        %v2447 = vadd.f32 %v2254, %v2446
        %v2448 = vpop.f32.mrf.mxu0
        %v2449 = vadd.f32 %v2256, %v2448
        %v2450 = vpop.f32.mrf.mxu0
        %v2451 = vadd.f32 %v2258, %v2450
        %2452 = vmatprep.mubr.bf16.mxu0 %v946
        %2453 = vmatmul.mubr.bf16.gmra.mxu0 %v945
        %v2454 = vpop.f32.mrf.mxu0
        %v2455 = vadd.f32 %v2262, %v2454
        %v2456 = vpop.f32.mrf.mxu0
        %v2457 = vadd.f32 %v2264, %v2456
        %v2458 = vpop.f32.mrf.mxu0
        %v2459 = vadd.f32 %v2266, %v2458
        %v2460 = vpop.f32.mrf.mxu0
        %v2461 = vadd.f32 %v2268, %v2460
        %2462 = vmatprep.mubr.bf16.mxu0 %v954
        %2463 = vmatmul.mubr.bf16.gmra.mxu0 %v953
        %v2464 = vpop.f32.mrf.mxu0
        %v2465 = vadd.f32 %v2272, %v2464
        %v2466 = vpop.f32.mrf.mxu0
        %v2467 = vadd.f32 %v2274, %v2466
        %v2468 = vpop.f32.mrf.mxu0
        %v2469 = vadd.f32 %v2276, %v2468
        %v2470 = vpop.f32.mrf.mxu0
        %v2471 = vadd.f32 %v2278, %v2470
        %2472 = vmatprep.mubr.bf16.mxu0 %v962
        %2473 = vmatmul.mubr.bf16.gmra.mxu0 %v961
        %v2474 = vpop.f32.mrf.mxu0
        %v2475 = vadd.f32 %v2282, %v2474
        %v2476 = vpop.f32.mrf.mxu0
        %v2477 = vadd.f32 %v2284, %v2476
        %v2478 = vpop.f32.mrf.mxu0
        %v2479 = vadd.f32 %v2286, %v2478
        %v2480 = vpop.f32.mrf.mxu0
        %v2481 = vadd.f32 %v2288, %v2480
        %2482 = vmatprep.mubr.bf16.mxu0 %v970
        %2483 = vmatmul.mubr.bf16.gmra.mxu0 %v969
        %v2484 = vpop.f32.mrf.mxu0
        %v2485 = vadd.f32 %v2292, %v2484
        %v2486 = vpop.f32.mrf.mxu0
        %v2487 = vadd.f32 %v2294, %v2486
        %v2488 = vpop.f32.mrf.mxu0
        %v2489 = vadd.f32 %v2296, %v2488
        %v2490 = vpop.f32.mrf.mxu0
        %v2491 = vadd.f32 %v2298, %v2490
        %2492 = vmatprep.mubr.bf16.mxu0 %v978
        %2493 = vmatmul.mubr.bf16.gmra.mxu0 %v977
        %v2494 = vpop.f32.mrf.mxu0
        %v2495 = vadd.f32 %v2302, %v2494
        %v2496 = vpop.f32.mrf.mxu0
        %v2497 = vadd.f32 %v2304, %v2496
        %v2498 = vpop.f32.mrf.mxu0
        %v2499 = vadd.f32 %v2306, %v2498
        %v2500 = vpop.f32.mrf.mxu0
        %v2501 = vadd.f32 %v2308, %v2500
        %2502 = vmatprep.mubr.bf16.mxu0 %v986
        %2503 = vmatmul.mubr.bf16.gmra.mxu0 %v985
        %v2504 = vpop.f32.mrf.mxu0
        %v2505 = vadd.f32 %v2312, %v2504
        %v2506 = vpop.f32.mrf.mxu0
        %v2507 = vadd.f32 %v2314, %v2506
        %v2508 = vpop.f32.mrf.mxu0
        %v2509 = vadd.f32 %v2316, %v2508
        %v2510 = vpop.f32.mrf.mxu0
        %v2511 = vadd.f32 %v2318, %v2510
        %2512 = vmatprep.mubr.bf16.mxu0 %v994
        %2513 = vmatmul.mubr.bf16.gmra.mxu0 %v993
        %v2514 = vpop.f32.mrf.mxu0
        %v2515 = vadd.f32 %v2322, %v2514
        %v2516 = vpop.f32.mrf.mxu0
        %v2517 = vadd.f32 %v2324, %v2516
        %v2518 = vpop.f32.mrf.mxu0
        %v2519 = vadd.f32 %v2326, %v2518
        %v2520 = vpop.f32.mrf.mxu0
        %v2521 = vadd.f32 %v2328, %v2520
        %2522 = vmatprep.mubr.bf16.mxu0 %v1002
        %2523 = vmatmul.mubr.bf16.gmra.mxu0 %v1001
        %v2524 = vpop.f32.mrf.mxu0
        %v2525 = vadd.f32 %v2332, %v2524
        %v2526 = vpop.f32.mrf.mxu0
        %v2527 = vadd.f32 %v2334, %v2526
        %v2528 = vpop.f32.mrf.mxu0
        %v2529 = vadd.f32 %v2336, %v2528
        %v2530 = vpop.f32.mrf.mxu0
        %v2531 = vadd.f32 %v2338, %v2530
        %2532 = vmatprep.mubr.bf16.mxu0 %v1010
        %2533 = vmatmul.mubr.bf16.gmra.mxu0 %v1009
        %v2534 = vpop.f32.mrf.mxu0
        %v2535 = vadd.f32 %v2342, %v2534
        %v2536 = vpop.f32.mrf.mxu0
        %v2537 = vadd.f32 %v2344, %v2536
        %v2538 = vpop.f32.mrf.mxu0
        %v2539 = vadd.f32 %v2346, %v2538
        %v2540 = vpop.f32.mrf.mxu0
        %v2541 = vadd.f32 %v2348, %v2540
        %2542 = vmatprep.mubr.bf16.mxu0 %v1018
        %2543 = vmatmul.mubr.bf16.gmra.mxu0 %v1017
        %v2544 = vpop.f32.mrf.mxu0
        %v2545 = vadd.f32 %v2352, %v2544
        %v2546 = vpop.f32.mrf.mxu0
        %v2547 = vadd.f32 %v2354, %v2546
        %v2548 = vpop.f32.mrf.mxu0
        %v2549 = vadd.f32 %v2356, %v2548
        %v2550 = vpop.f32.mrf.mxu0
        %v2551 = vadd.f32 %v2358, %v2550
        %2552 = vmatprep.mubr.bf16.mxu0 %v1026
        %2553 = vmatmul.mubr.bf16.gmra.mxu0 %v1025
        %v2554 = vpop.f32.mrf.mxu0
        %v2555 = vadd.f32 %v2362, %v2554
        %v2556 = vpop.f32.mrf.mxu0
        %v2557 = vadd.f32 %v2364, %v2556
        %v2558 = vpop.f32.mrf.mxu0
        %v2559 = vadd.f32 %v2366, %v2558
        %v2560 = vpop.f32.mrf.mxu0
        %v2561 = vadd.f32 %v2368, %v2560
        %2562 = vmatprep.mubr.bf16.mxu0 %v1034
        %2563 = vmatmul.mubr.bf16.gmra.mxu0 %v1033
        %v2564 = vpop.f32.mrf.mxu0
        %v2565 = vadd.f32 %v2372, %v2564
        %v2566 = vpop.f32.mrf.mxu0
        %v2567 = vadd.f32 %v2374, %v2566
        %v2568 = vpop.f32.mrf.mxu0
        %v2569 = vadd.f32 %v2376, %v2568
        %v2570 = vpop.f32.mrf.mxu0
        %v2571 = vadd.f32 %v2378, %v2570
        %2572 = vmatprep.mubr.bf16.mxu0 %v1042
        %2573 = vmatmul.mubr.bf16.gmra.mxu0 %v1041
        %v2574 = vpop.f32.mrf.mxu0
        %v2575 = vadd.f32 %v2382, %v2574
        %v2576 = vpop.f32.mrf.mxu0
        %v2577 = vadd.f32 %v2384, %v2576
        %v2578 = vpop.f32.mrf.mxu0
        %v2579 = vadd.f32 %v2386, %v2578
        %v2580 = vpop.f32.mrf.mxu0
        %v2581 = vadd.f32 %v2388, %v2580
        %2582 = vdwg.mxu0
        %v2583 = vtanh.pop %v2425
        %v2584 = vtanh.pop %v2427
        %v2585 = vtanh.pop %v2429
        %v2586 = vtanh.pop %v2431
        %v2587 = vtanh.pop %v2435
        %v2588 = vtanh.pop %v2437
        %v2589 = vtanh.pop %v2439
        %v2590 = vtanh.pop %v2441
        %v2591 = vtanh.pop %v2445
        %v2592 = vtanh.pop %v2447
        %v2593 = vtanh.pop %v2449
        %v2594 = vtanh.pop %v2451
        %v2595 = vtanh.pop %v2455
        %v2596 = vtanh.pop %v2457
        %v2597 = vtanh.pop %v2459
        %v2598 = vtanh.pop %v2461
        %v2599 = vtanh.pop %v2465
        %v2600 = vtanh.pop %v2467
        %v2601 = vtanh.pop %v2469
        %v2602 = vtanh.pop %v2471
        %v2603 = vtanh.pop %v2475
        %v2604 = vtanh.pop %v2477
        %v2605 = vtanh.pop %v2479
        %v2606 = vtanh.pop %v2481
        %v2607 = vtanh.pop %v2485
        %v2608 = vtanh.pop %v2487
        %v2609 = vtanh.pop %v2489
        %v2610 = vtanh.pop %v2491
        %v2611 = vtanh.pop %v2495
        %v2612 = vtanh.pop %v2497
        %v2613 = vtanh.pop %v2499
        %v2614 = vtanh.pop %v2501
        %v2615 = vtanh.pop %v2505
        %v2616 = vtanh.pop %v2507
        %v2617 = vtanh.pop %v2509
        %v2618 = vtanh.pop %v2511
        %v2619 = vtanh.pop %v2515
        %v2620 = vtanh.pop %v2517
        %v2621 = vtanh.pop %v2519
        %v2622 = vtanh.pop %v2521
        %v2623 = vtanh.pop %v2525
        %v2624 = vtanh.pop %v2527
        %v2625 = vtanh.pop %v2529
        %v2626 = vtanh.pop %v2531
        %v2627 = vtanh.pop %v2535
        %v2628 = vtanh.pop %v2537
        %v2629 = vtanh.pop %v2539
        %v2630 = vtanh.pop %v2541
        %v2631 = vtanh.pop %v2545
        %v2632 = vtanh.pop %v2547
        %v2633 = vtanh.pop %v2549
        %v2634 = vtanh.pop %v2551
        %v2635 = vtanh.pop %v2555
        %v2636 = vtanh.pop %v2557
        %v2637 = vtanh.pop %v2559
        %v2638 = vtanh.pop %v2561
        %v2639 = vtanh.pop %v2565
        %v2640 = vtanh.pop %v2567
        %v2641 = vtanh.pop %v2569
        %v2642 = vtanh.pop %v2571
        %v2643 = vtanh.pop %v2575
        %v2644 = vtanh.pop %v2577
        %v2645 = vtanh.pop %v2579
        %v2646 = vtanh.pop %v2581
        %v2647 = vpack.c.bf16 %v2585, %v2583
        %v2648 = vpack.c.bf16 %v2586, %v2584
        %v2649 = vpack.c.bf16 %v2589, %v2587
        %v2650 = vpack.c.bf16 %v2590, %v2588
        %v2651 = vpack.c.bf16 %v2593, %v2591
        %v2652 = vpack.c.bf16 %v2594, %v2592
        %v2653 = vpack.c.bf16 %v2597, %v2595
        %v2654 = vpack.c.bf16 %v2598, %v2596
        %v2655 = vpack.c.bf16 %v2601, %v2599
        %v2656 = vpack.c.bf16 %v2602, %v2600
        %v2657 = vpack.c.bf16 %v2605, %v2603
        %v2658 = vpack.c.bf16 %v2606, %v2604
        %v2659 = vpack.c.bf16 %v2609, %v2607
        %v2660 = vpack.c.bf16 %v2610, %v2608
        %v2661 = vpack.c.bf16 %v2613, %v2611
        %v2662 = vpack.c.bf16 %v2614, %v2612
        %v2663 = vpack.c.bf16 %v2617, %v2615
        %v2664 = vpack.c.bf16 %v2618, %v2616
        %v2665 = vpack.c.bf16 %v2621, %v2619
        %v2666 = vpack.c.bf16 %v2622, %v2620
        %v2667 = vpack.c.bf16 %v2625, %v2623
        %v2668 = vpack.c.bf16 %v2626, %v2624
        %v2669 = vpack.c.bf16 %v2629, %v2627
        %v2670 = vpack.c.bf16 %v2630, %v2628
        %v2671 = vpack.c.bf16 %v2633, %v2631
        %v2672 = vpack.c.bf16 %v2634, %v2632
        %v2673 = vpack.c.bf16 %v2637, %v2635
        %v2674 = vpack.c.bf16 %v2638, %v2636
        %v2675 = vpack.c.bf16 %v2641, %v2639
        %v2676 = vpack.c.bf16 %v2642, %v2640
        %v2677 = vpack.c.bf16 %v2645, %v2643
        %v2678 = vpack.c.bf16 %v2646, %v2644
        %v2679 = vld [vmem:[%s3] sm:$0x3]
        %v2680 = vld [vmem:[#allocation2] sm:$0x1]
        %2682 = vset.pattern.permute.xlu0 0
        %2683 = vperm.xlu0 %2682, %v2680
        %v2684 = vpop.permute.xlu0 %2683
        %v2686 = vlaneseq
        %v2687 = vshrl.u32 %v2686, 7
        %v2688 = vsub.s32 0, %v2687
        %v2689 = vrot.slane %v2684, %v2688
        %v2692 = vunpack.c.l.s4 1966171168
        %v2693 = vunpack.c.0.s8 %v2692
        %v2694 = vlaneseq
        %v2695 = vshrl.u32 %v2694, 7
        %v2696 = vsub.s32 %v2693, %v2695
        %v2697 = vrot.slane %v2679, %v2696
        %v2698 = vcombine.high %v2697, %v2697
        %v2700 = vunpack.c.l.s4 1966171168
        %v2701 = vunpack.c.0.s8 %v2700
        %v2702 = vlaneseq
        %v2703 = vshrl.u32 %v2702, 7
        %v2704 = vsub.s32 %v2701, %v2703
        %v2705 = vrot.slane %v2697, %v2704
        %v2707 = vunpack.c.l.s4 1966171168
        %v2708 = vunpack.c.0.s8 %v2707
        %v2709 = vlaneseq
        %v2710 = vshrl.u32 %v2709, 7
        %v2711 = vsub.s32 %v2708, %v2710
        %v2712 = vrot.slane %v2698, %v2711
        %2715 = vmatprep.subr.bf16.mxu0 %v2662
        %2716 = vmatpush1.bf16.xpose.msra.mxu0 %v2661
        %2717 = vmatprep.subr.bf16.mxu0 %v2660
        %2718 = vmatpush1.bf16.xpose.msra.mxu0 %v2659
        %2719 = vmatprep.subr.bf16.mxu0 %v2658
        %2720 = vmatpush1.bf16.xpose.msra.mxu0 %v2657
        %2721 = vmatprep.subr.bf16.mxu0 %v2656
        %2722 = vmatpush1.bf16.xpose.msra.mxu0 %v2655
        %2723 = vmatprep.subr.bf16.mxu0 %v2654
        %2724 = vmatpush1.bf16.xpose.msra.mxu0 %v2653
        %2725 = vmatprep.subr.bf16.mxu0 %v2652
        %2726 = vmatpush1.bf16.xpose.msra.mxu0 %v2651
        %2727 = vmatprep.subr.bf16.mxu0 %v2650
        %2728 = vmatpush1.bf16.xpose.msra.mxu0 %v2649
        %2729 = vmatprep.subr.bf16.mxu0 %v2648
        %2730 = vmatpush1.bf16.xpose.msra.mxu0 %v2647
        %2731 = vmatprep.subr.bf16.mxu0 %v2678
        %2732 = vmatpush2.bf16.xpose.msra.mxu0 %v2677
        %2733 = vmatprep.subr.bf16.mxu0 %v2676
        %2734 = vmatpush2.bf16.xpose.msra.mxu0 %v2675
        %2735 = vmatprep.subr.bf16.mxu0 %v2674
        %2736 = vmatpush2.bf16.xpose.msra.mxu0 %v2673
        %2737 = vmatprep.subr.bf16.mxu0 %v2672
        %2738 = vmatpush2.bf16.xpose.msra.mxu0 %v2671
        %2739 = vmatprep.subr.bf16.mxu0 %v2670
        %2740 = vmatpush2.bf16.xpose.msra.mxu0 %v2669
        %2741 = vmatprep.subr.bf16.mxu0 %v2668
        %2742 = vmatpush2.bf16.xpose.msra.mxu0 %v2667
        %2743 = vmatprep.subr.bf16.mxu0 %v2666
        %2744 = vmatpush2.bf16.xpose.msra.mxu0 %v2665
        %2745 = vmatprep.subr.bf16.mxu0 %v2664
        %2746 = vmatpush2.bf16.xpose.msra.mxu0 %v2663
        %2747 = vmatprep.mubr.bf16.mxu0 %v2712
        %2748 = vmatmul.mubr.bf16.gmra.mxu0 %v2705
        %v2749 = vpop.f32.mrf.mxu0
        %v2750 = vadd.f32 %v2689, %v2749
        %v2751 = vpop.f32.mrf.mxu0
        %v2752 = vadd.f32 %v2689, %v2751
        %v2753 = vpop.f32.mrf.mxu0
        %v2754 = vpop.f32.mrf.mxu0
        %2755 = vdwg.mxu0
        %v2758 = vcombine.low %v2750, %v2752
        %v2760 = vunpack.c.l.s4 1966171168
        %v2761 = vunpack.c.0.s8 %v2760
        %v2762 = vlaneseq
        %v2763 = vshrl.u32 %v2762, 7
        %v2764 = vsub.s32 %v2761, %v2763
        %v2765 = vrot.slane %v2758, %v2764
        %v2767 = vunpack.c.l.s4 1966171168
        %v2768 = vunpack.c.0.s8 %v2767
        %v2769 = vlaneseq
        %v2770 = vshrl.u32 %v2769, 7
        %v2771 = vsub.s32 %v2768, %v2770
        %v2772 = vrot.slane %v2765, %v2771
        %v2774 = vlaneseq
        %vm2775 = vcmp.ge.s32.totalorder %v2774, 0
        %vm2776 = vcmp.lt.s32.totalorder %v2774, 256
        %vm2777 = vmand %vm2775, %vm2776
        %2778 = vst.msk [vmem:[%s260] sm:$0x3] %vm2777, %v2772
        %s2779 = sand.u32 %s143, 1
        %s2780 = scalar_lea.sflag [#allocation5], %s2779
        %s2781 = sand.u32 %s143, 1
        %s2782 = smul.addr %s2781, 2
        %s2783 = scalar_lea.vmem [#allocation8], %s2782
        // Predicated region
        $region49: #{tpu_custom_call.1} parent=39 // pred_check
          %p2784 = pneg %p153
        $region50: #{tpu_custom_call.1} parent=39 // pred_check_branch
          %2786 = sbr.rel (%p2784) target = $region52
        $region51: #{tpu_custom_call.1} parent=39 // pred_region
          %s2787 = smul.u32 2, %s25
          %s2789 = ssub.s32 32, 32
          %2790 = vsyncadd %s2780, %s2789
          %s2791 = smul.addr %s2787, 16
          %s2792 = scalar_lea.hbm %s5, %s2791
          %s2794 = sshll.u32 %s2783, 4
          %s2795 = int_to_ptr.vmem [resolvable:$true] %s2794
          %2797 = dma.vmem_to_hbm [thread:$0]  %s2795, 32, %s2792, %s2780
        $region52: #{tpu_custom_call.1} parent=39 // pred_fallthru
          _
      $region40: #{tpu_custom_call.1} parent=5 // pred_fallthru
        _
      %p2798 = scmp.le.s32.totalorder 2, %s20
      // Predicated region
      $region53: #{tpu_custom_call.1} parent=5 // pred_check
        %p2799 = pneg %p2798
      $region54: #{tpu_custom_call.1} parent=5 // pred_check_branch
        %2801 = sbr.rel (%p2799) target = $region56
      $region55: #{tpu_custom_call.1} parent=5 // pred_region
        %s2802 = ssub.s32 %s20, 2
        // Predicated region
        $region57: #{tpu_custom_call.1} parent=55 // pred_check
          %p2803 = pneg %p159
        $region58: #{tpu_custom_call.1} parent=55 // pred_check_branch
          %2805 = sbr.rel (%p2803) target = $region60
        $region59: #{tpu_custom_call.1} parent=55 // pred_region
          %s2806 = sand.u32 %s144, 1
          %s2807 = scalar_lea.sflag [#allocation5], %s2806
          %s2808 = sand.u32 %s144, 1
          %s2809 = smul.addr %s2808, 2
          %s2810 = scalar_lea.vmem [#allocation8], %s2809
          %2811 = dma.done %s2807, 32
        $region60: #{tpu_custom_call.1} parent=55 // pred_fallthru
          _
      $region56: #{tpu_custom_call.1} parent=5 // pred_fallthru
        _
    $region6: #{tpu_custom_call.1} parent=1 // loop_footer
      %s24 = sadd.s32 1, %s20
    $region7: #{tpu_custom_call.1} parent=1 // loop_footer_branch
      %19 = sbr.rel target = $region3
    $region8: #{tpu_custom_call.1} parent=1 // loop_exit
      _
    %2812 = vsyncpa [#allocation4], 1
    %s2813 = scalar_lea.sflag [#allocation4], 1
    %2814 = vsyncpa %s2813, 1
    %2815 = vsyncpa [#allocation7], 1
    %2816 = vsyncpa [#allocation5], 1
    %s2817 = scalar_lea.sflag [#allocation5], 1
    %2818 = vsyncpa %s2817, 1

</llo_original>
